<compile_context>
chip_gen: v6e
topology: v6e:2x2x1
jax: 0.10.0
libtpu: 0.0.40
codegen_flags: <defaults>
</compile_context>

<pallas_src>
import functools

import jax
import jax.numpy as jnp
from jax.experimental import pallas as pl
from jax.experimental.pallas import tpu as pltpu

CP = 128  # lane-padded channel width used for all internal activations/weights


def _round_up(n, m):
    return (n + m - 1) // m * m


def _pad_to(a, shape):
    return jnp.pad(a, [(0, t - s) for s, t in zip(a.shape, shape)])


# ---------------------------------------------------------------------------
# Fused kernel body (one batch element per grid step)
# ---------------------------------------------------------------------------

def _tcn_fused_kernel(*refs, layer_meta, K, L, c_in, halo):
    """Fused TCN forward for one batch element.

    refs layout:
      refs[0]                 x_ref   (1, L, c_in)  channels-last, TRUE channel count
      per layer (in order):   w1 (K*CP, CP) bf16, b1 (1, CP) f32,
                              wfg (K*CP, 2CP) bf16, bfg (1, 2CP) f32,
                              [wd (CP, CP) bf16, bd (1, CP) f32]  if downsampling
      then:                   wl (CP, out) bf16, bl (1, out) f32     final Linear
      refs[-2]                o_ref   (1, L, out)
      refs[-1]                act_ref (halo+L, CP) f32 VMEM scratch
    """
    x_ref = refs[0]
    o_ref = refs[-2]
    act_ref = refs[-1]
    w_refs = refs[1:-2]

    # Re-zero the resident buffer each grid step: the halo rows implement the
    # causal left zero-padding for every dilation, and lanes >= c_in are the
    # channel padding for this batch element.
    act_ref[...] = jnp.zeros_like(act_ref)
    # Only the true input channels travel through HBM; drop them into lanes [0,c_in).
    act_ref[pl.ds(halo, L), pl.ds(0, c_in)] = x_ref[0]

    def dot_bf16(x, w_ref, b_ref):
        # bf16 MXU operands, f32 accumulation + f32 bias add.
        return jnp.dot(x.astype(jnp.bfloat16), w_ref[...],
                       preferred_element_type=jnp.float32) + b_ref[...]

    def taps(d):
        # K dilated causal taps merged along lanes -> a single (L, K*CP) operand,
        # so the whole conv is ONE (256-deep for K=2) MXU contraction.
        base = halo - (K - 1) * d
        return jnp.concatenate(
            [act_ref[pl.ds(base + j * d, L), :] for j in range(K)], axis=-1)

    ptr = 0
    for meta in layer_meta:  # static Python loop over TemporalBlocks
        d = meta["dilation"]

        w1, b1, wfg, bfg = w_refs[ptr:ptr + 4]
        ptr += 4
        if meta["ds"]:
            wd, bd = w_refs[ptr:ptr + 2]
            ptr += 2

        # --- conv1 -> chomp -> relu  (dropout is identity in eval mode) ---
        out1 = jnp.maximum(dot_bf16(taps(d), w1, b1), 0.0)

        # --- residual path (read the block input BEFORE act_ref is overwritten) ---
        x_cur = act_ref[pl.ds(halo, L), :]
        res = dot_bf16(x_cur, wd, bd) if meta["ds"] else x_cur

        # --- gated convs on out1: merged filter+gate weights -> one matmul; act_ref
        #     (halo rows still zero) is reused as the out1 staging buffer ---
        act_ref[pl.ds(halo, L), :] = out1
        fg = dot_bf16(taps(d), wfg, bfg)
        f = jnp.tanh(fg[:, :CP])
        g = jax.nn.sigmoid(fg[:, CP:])

        # --- relu(filter * gate + residual) becomes the next block's input ---
        act_ref[pl.ds(halo, L), :] = jnp.maximum(f * g + res, 0.0)

    # --- final Linear over channels; only the true out_size lanes go back to HBM ---
    wl, bl = w_refs[ptr:ptr + 2]
    y = dot_bf16(act_ref[pl.ds(halo, L), :], wl, bl)
    o_ref[0] = y.astype(o_ref.dtype)


# ---------------------------------------------------------------------------
# Parameter init (deterministic, mirrors the PyTorch module's shapes)
# ---------------------------------------------------------------------------

def init_tcn_params(key, input_size, output_size, num_channels, kernel_size):
    params = []
    in_c = input_size
    for i, out_c in enumerate(num_channels):
        keys = jax.random.split(key, 10)
        key = keys[-1]
        layer = {
            "dilation": 2 ** i,
            # conv weights stored as (K, Cin, Cout) for channels-last matmuls
            "w1": 0.01 * jax.random.normal(keys[0], (kernel_size, in_c, out_c), jnp.float32),
            "b1": 0.01 * jax.random.normal(keys[1], (1, out_c), jnp.float32),
            "wf": 0.01 * jax.random.normal(keys[2], (kernel_size, out_c, out_c), jnp.float32),
            "bf": 0.01 * jax.random.normal(keys[3], (1, out_c), jnp.float32),
            "wg": 0.01 * jax.random.normal(keys[4], (kernel_size, out_c, out_c), jnp.float32),
            "bg": 0.01 * jax.random.normal(keys[5], (1, out_c), jnp.float32),
        }
        if in_c != out_c:
            layer["wd"] = 0.01 * jax.random.normal(keys[6], (in_c, out_c), jnp.float32)
            layer["bd"] = 0.01 * jax.random.normal(keys[7], (1, out_c), jnp.float32)
        params.append(layer)
        in_c = out_c
    k1, k2, _ = jax.random.split(key, 3)
    lin = {
        "w": (1.0 / jnp.sqrt(in_c)) * jax.random.normal(k1, (in_c, output_size), jnp.float32),
        "b": (1.0 / jnp.sqrt(in_c)) * jax.random.normal(k2, (1, output_size), jnp.float32),
    }
    return params, lin


# ---------------------------------------------------------------------------
# Full forward (single fused pallas_call)
# ---------------------------------------------------------------------------

def tcn_forward(x_ncl, params, lin, kernel_size):
    """x_ncl: (B, C_in, L) like PyTorch.  Returns (B, output_size, L)."""
    B, c_in, L = x_ncl.shape
    K = kernel_size
    out_size = lin["w"].shape[1]

    # channels-last with the TRUE channel count as the (full-extent) last block dim:
    # no 128-wide pad slab round-trips through HBM on either side of the kernel.
    # (The tiny NCL<->NLC transposes stay in XLA; negligible at these sizes.)
    x = jnp.transpose(x_ncl, (0, 2, 1)).astype(jnp.float32)  # (B, L, c_in)

    max_pad = (K - 1) * max(int(l["dilation"]) for l in params)
    halo = _round_up(max(max_pad, 1), 8)  # sublane-aligned causal-padding halo

    weights = []
    specs = [pl.BlockSpec((1, L, c_in), lambda b: (b, 0, 0))]
    layer_meta = []

    def add_weight(arr, dtype):
        arr = arr.astype(dtype)
        weights.append(arr)
        # constant block index: fetched once, stays VMEM-resident across the grid
        specs.append(pl.BlockSpec(arr.shape, lambda b, _nd=arr.ndim: (0,) * _nd))

    for layer in params:
        has_ds = "wd" in layer
        layer_meta.append({"dilation": int(layer["dilation"]), "ds": has_ds})
        # conv1: (K, Cin, Cout) -> lane-padded, K taps folded into the contraction
        # dim -> (K*CP, CP)   (256-deep for K=2: native v6e/v7x MXU depth)
        add_weight(_pad_to(layer["w1"], (K, CP, CP)).reshape(K * CP, CP), jnp.bfloat16)
        add_weight(_pad_to(layer["b1"], (1, CP)), jnp.float32)
        # filter + gate merged along output lanes -> one (K*CP, 2*CP) matmul
        wfg = jnp.concatenate([_pad_to(layer["wf"], (K, CP, CP)),
                               _pad_to(layer["wg"], (K, CP, CP))], axis=-1)
        add_weight(wfg.reshape(K * CP, 2 * CP), jnp.bfloat16)
        bfg = jnp.concatenate([_pad_to(layer["bf"], (1, CP)),
                               _pad_to(layer["bg"], (1, CP))], axis=-1)
        add_weight(bfg, jnp.float32)
        if has_ds:
            add_weight(_pad_to(layer["wd"], (CP, CP)), jnp.bfloat16)
            add_weight(_pad_to(layer["bd"], (1, CP)), jnp.float32)

    add_weight(_pad_to(lin["w"], (CP, out_size)), jnp.bfloat16)
    add_weight(lin["b"], jnp.float32)

    kern = functools.partial(_tcn_fused_kernel, layer_meta=tuple(layer_meta),
                             K=K, L=L, c_in=c_in, halo=halo)

    # One batch element per grid step; "parallel" lets v7x's two TensorCores split
    # the batch (v5e/v6e just iterate).
    # TODO(synk): for large B (or long L) process several batch elements / an L-tile
    # per step so each matmul sees >=128 rows; at B=2, L=16 the kernel is
    # overhead-bound regardless and this keeps the v7x batch split exact.
    out_nlc = pl.pallas_call(
        kern,
        out_shape=jax.ShapeDtypeStruct((B, L, out_size), jnp.float32),
        grid=(B,),
        in_specs=specs,
        out_specs=pl.BlockSpec((1, L, out_size), lambda b: (b, 0, 0)),
        scratch_shapes=[
            pltpu.VMEM((halo + L, CP), jnp.float32),  # resident activation (+ zero halo)
        ],
        compiler_params=pltpu.CompilerParams(dimension_semantics=("parallel",)),
    )(x, *weights)

    return jnp.transpose(out_nlc, (0, 2, 1))  # (B, output_size, L) like PyTorch


# ---------------------------------------------------------------------------
# Pure-JAX f32 reference (mirrors the PyTorch forward in eval mode)
# ---------------------------------------------------------------------------

def _ref_tcn_forward(x_ncl, params, lin, kernel_size):
    K = kernel_size
    x = jnp.transpose(x_ncl, (0, 2, 1)).astype(jnp.float32)  # (B, L, C)
    B, L, _ = x.shape

    def causal_conv(inp, w, b, d):
        pad = (K - 1) * d
        inp_p = jnp.pad(inp, ((0, 0), (pad, 0), (0, 0)))
        out = jnp.zeros((B, L, w.shape[2]), jnp.float32)
        for j in range(K):
            out = out + inp_p[:, j * d:j * d + L, :] @ w[j]
        return out + b

    for layer in params:
        d = int(layer["dilation"])
        out1 = jax.nn.relu(causal_conv(x, layer["w1"], layer["b1"], d))
        f = jnp.tanh(causal_conv(out1, layer["wf"], layer["bf"], d))
        g = jax.nn.sigmoid(causal_conv(out1, layer["wg"], layer["bg"], d))
        res = x @ layer["wd"] + layer["bd"] if "wd" in layer else x
        x = jax.nn.relu(f * g + res)
    y = x @ lin["w"] + lin["b"]
    return jnp.transpose(y, (0, 2, 1))


# ---------------------------------------------------------------------------
# Main
# ---------------------------------------------------------------------------

if __name__ == "__main__":
    B, INPUT_SIZE, L = 2, 4, 16
    OUTPUT_SIZE = 8
    NUM_CHANNELS = [64, 32, 24]
    KERNEL_SIZE = 2

    key = jax.random.PRNGKey(0)
    k_params, k_x = jax.random.split(key)
    params, lin = init_tcn_params(k_params, INPUT_SIZE, OUTPUT_SIZE,
                                  NUM_CHANNELS, KERNEL_SIZE)

    x = jax.random.normal(k_x, (B, INPUT_SIZE, L), jnp.float32)  # NCL like PyTorch

    # TODO(synk): dropout omitted (eval-mode identity); raw weights are used as the
    # weight_norm effective weights (exact at init).
    out = tcn_forward(x, params, lin, KERNEL_SIZE)
    out = jax.block_until_ready(out)
    assert out.shape == (B, OUTPUT_SIZE, L), out.shape
    assert bool(jnp.all(jnp.isfinite(out)))

    # Numerics check vs a pure-JAX f32 reference (loose tolerance covers the bf16
    # MXU operands; accumulation and all elementwise math stay f32 in the kernel).
    ref = _ref_tcn_forward(x, params, lin, KERNEL_SIZE)
    max_err = float(jnp.max(jnp.abs(out - ref)))
    assert max_err < 2e-3, f"max abs err vs f32 reference: {max_err}"

    print("KERNEL_OK")
</pallas_src>

<mosaic_0001>
module attributes {stable_mosaic.version = 11 : i64} {
  func.func @_tcn_fused_kernel(%arg0: i32, %arg1: memref<1x16x4xf32, #tpu.memory_space<vmem>>, %arg2: memref<256x128xbf16, #tpu.memory_space<vmem>>, %arg3: memref<1x128xf32, #tpu.memory_space<vmem>>, %arg4: memref<256x256xbf16, #tpu.memory_space<vmem>>, %arg5: memref<1x256xf32, #tpu.memory_space<vmem>>, %arg6: memref<128x128xbf16, #tpu.memory_space<vmem>>, %arg7: memref<1x128xf32, #tpu.memory_space<vmem>>, %arg8: memref<256x128xbf16, #tpu.memory_space<vmem>>, %arg9: memref<1x128xf32, #tpu.memory_space<vmem>>, %arg10: memref<256x256xbf16, #tpu.memory_space<vmem>>, %arg11: memref<1x256xf32, #tpu.memory_space<vmem>>, %arg12: memref<128x128xbf16, #tpu.memory_space<vmem>>, %arg13: memref<1x128xf32, #tpu.memory_space<vmem>>, %arg14: memref<256x128xbf16, #tpu.memory_space<vmem>>, %arg15: memref<1x128xf32, #tpu.memory_space<vmem>>, %arg16: memref<256x256xbf16, #tpu.memory_space<vmem>>, %arg17: memref<1x256xf32, #tpu.memory_space<vmem>>, %arg18: memref<128x128xbf16, #tpu.memory_space<vmem>>, %arg19: memref<1x128xf32, #tpu.memory_space<vmem>>, %arg20: memref<128x8xbf16, #tpu.memory_space<vmem>>, %arg21: memref<1x8xf32, #tpu.memory_space<vmem>>, %arg22: memref<1x16x8xf32, #tpu.memory_space<vmem>>, %arg23: memref<24x128xf32, #tpu.memory_space<vmem>>) attributes {dimension_semantics = [#tpu.dimension_semantics<parallel>], iteration_bounds = array<i64: 2>, scalar_prefetch = 0 : i64, scratch_operands = 1 : i64, tpu.core_type = #tpu.core_type<tc>, window_params = [{transform_indices = @transform_0, window_bounds = array<i64: 1, 16, 4>}, {pipeline_mode = #tpu.pipeline_mode<synchronous>, transform_indices = @transform_1, window_bounds = array<i64: 256, 128>}, {pipeline_mode = #tpu.pipeline_mode<synchronous>, transform_indices = @transform_2, window_bounds = array<i64: 1, 128>}, {pipeline_mode = #tpu.pipeline_mode<synchronous>, transform_indices = @transform_3, window_bounds = array<i64: 256, 256>}, {pipeline_mode = #tpu.pipeline_mode<synchronous>, transform_indices = @transform_4, window_bounds = array<i64: 1, 256>}, {pipeline_mode = #tpu.pipeline_mode<synchronous>, transform_indices = @transform_5, window_bounds = array<i64: 128, 128>}, {pipeline_mode = #tpu.pipeline_mode<synchronous>, transform_indices = @transform_6, window_bounds = array<i64: 1, 128>}, {pipeline_mode = #tpu.pipeline_mode<synchronous>, transform_indices = @transform_7, window_bounds = array<i64: 256, 128>}, {pipeline_mode = #tpu.pipeline_mode<synchronous>, transform_indices = @transform_8, window_bounds = array<i64: 1, 128>}, {pipeline_mode = #tpu.pipeline_mode<synchronous>, transform_indices = @transform_9, window_bounds = array<i64: 256, 256>}, {pipeline_mode = #tpu.pipeline_mode<synchronous>, transform_indices = @transform_10, window_bounds = array<i64: 1, 256>}, {pipeline_mode = #tpu.pipeline_mode<synchronous>, transform_indices = @transform_11, window_bounds = array<i64: 128, 128>}, {pipeline_mode = #tpu.pipeline_mode<synchronous>, transform_indices = @transform_12, window_bounds = array<i64: 1, 128>}, {pipeline_mode = #tpu.pipeline_mode<synchronous>, transform_indices = @transform_13, window_bounds = array<i64: 256, 128>}, {pipeline_mode = #tpu.pipeline_mode<synchronous>, transform_indices = @transform_14, window_bounds = array<i64: 1, 128>}, {pipeline_mode = #tpu.pipeline_mode<synchronous>, transform_indices = @transform_15, window_bounds = array<i64: 256, 256>}, {pipeline_mode = #tpu.pipeline_mode<synchronous>, transform_indices = @transform_16, window_bounds = array<i64: 1, 256>}, {pipeline_mode = #tpu.pipeline_mode<synchronous>, transform_indices = @transform_17, window_bounds = array<i64: 128, 128>}, {pipeline_mode = #tpu.pipeline_mode<synchronous>, transform_indices = @transform_18, window_bounds = array<i64: 1, 128>}, {pipeline_mode = #tpu.pipeline_mode<synchronous>, transform_indices = @transform_19, window_bounds = array<i64: 128, 8>}, {pipeline_mode = #tpu.pipeline_mode<synchronous>, transform_indices = @transform_20, window_bounds = array<i64: 1, 8>}, {transform_indices = @transform_21, window_bounds = array<i64: 1, 16, 8>}]} {
    %cst = arith.constant 0.000000e+00 : f32
    %0 = vector.broadcast %cst : f32 to vector<24x128xf32>
    %c0 = arith.constant 0 : index
    %c0_0 = arith.constant 0 : index
    %1 = vector.load %arg23[%c0, %c0_0] : memref<24x128xf32, #tpu.memory_space<vmem>>, vector<24x128xf32>
    tpu.vector_store %arg23[%c0, %c0_0], %0 {strides = array<i32>} : memref<24x128xf32, #tpu.memory_space<vmem>>, vector<24x128xf32>,
    %c0_1 = arith.constant 0 : index
    %c0_2 = arith.constant 0 : index
    %c0_3 = arith.constant 0 : index
    %2 = vector.load %arg1[%c0_1, %c0_2, %c0_3] : memref<1x16x4xf32, #tpu.memory_space<vmem>>, vector<1x16x4xf32>
    %3 = vector.shape_cast %2 : vector<1x16x4xf32> to vector<16x4xf32>
    %c8 = arith.constant 8 : index
    %c0_4 = arith.constant 0 : index
    %4 = vector.load %arg23[%c8, %c0_4] : memref<24x128xf32, #tpu.memory_space<vmem>>, vector<16x4xf32>
    tpu.vector_store %arg23[%c8, %c0_4], %3 {strides = array<i32>} : memref<24x128xf32, #tpu.memory_space<vmem>>, vector<16x4xf32>,
    %c7 = arith.constant 7 : index
    %c0_5 = arith.constant 0 : index
    %5 = vector.load %arg23[%c7, %c0_5] : memref<24x128xf32, #tpu.memory_space<vmem>>, vector<16x128xf32>
    %c8_6 = arith.constant 8 : index
    %c0_7 = arith.constant 0 : index
    %6 = vector.load %arg23[%c8_6, %c0_7] : memref<24x128xf32, #tpu.memory_space<vmem>>, vector<16x128xf32>
    %7 = tpu.concatenate %5, %6 in 1 : vector<16x128xf32>, vector<16x128xf32> -> vector<16x256xf32>
    %8 = arith.truncf %7 : vector<16x256xf32> to vector<16x256xbf16>
    %c0_8 = arith.constant 0 : index
    %c0_9 = arith.constant 0 : index
    %9 = vector.load %arg2[%c0_8, %c0_9] : memref<256x128xbf16, #tpu.memory_space<vmem>>, vector<256x128xbf16>
    %cst_10 = arith.constant dense<0.000000e+00> : vector<16x128xf32>
    %10 = tpu.matmul %8, %9, %cst_10 {dimension_numbers = #tpu.dot_dimension_numbers<[1], [0], [0], [1], [0, 0, 1, 1], [], []>} : vector<16x256xbf16>, vector<256x128xbf16>, vector<16x128xf32> -> vector<16x128xf32>
    %c0_11 = arith.constant 0 : index
    %c0_12 = arith.constant 0 : index
    %11 = vector.load %arg3[%c0_11, %c0_12] : memref<1x128xf32, #tpu.memory_space<vmem>>, vector<1x128xf32>
    %12 = vector.broadcast %11 : vector<1x128xf32> to vector<16x128xf32>
    %13 = arith.addf %10, %12 : vector<16x128xf32>
    %cst_13 = arith.constant 0.000000e+00 : f32
    %14 = vector.broadcast %cst_13 : f32 to vector<16x128xf32>
    %15 = arith.maximumf %13, %14 : vector<16x128xf32>
    %c8_14 = arith.constant 8 : index
    %c0_15 = arith.constant 0 : index
    %16 = vector.load %arg23[%c8_14, %c0_15] : memref<24x128xf32, #tpu.memory_space<vmem>>, vector<16x128xf32>
    %17 = arith.truncf %16 : vector<16x128xf32> to vector<16x128xbf16>
    %c0_16 = arith.constant 0 : index
    %c0_17 = arith.constant 0 : index
    %18 = vector.load %arg6[%c0_16, %c0_17] : memref<128x128xbf16, #tpu.memory_space<vmem>>, vector<128x128xbf16>
    %cst_18 = arith.constant dense<0.000000e+00> : vector<16x128xf32>
    %19 = tpu.matmul %17, %18, %cst_18 {dimension_numbers = #tpu.dot_dimension_numbers<[1], [0], [0], [1], [0, 0, 1, 1], [], []>} : vector<16x128xbf16>, vector<128x128xbf16>, vector<16x128xf32> -> vector<16x128xf32>
    %c0_19 = arith.constant 0 : index
    %c0_20 = arith.constant 0 : index
    %20 = vector.load %arg7[%c0_19, %c0_20] : memref<1x128xf32, #tpu.memory_space<vmem>>, vector<1x128xf32>
    %21 = vector.broadcast %20 : vector<1x128xf32> to vector<16x128xf32>
    %22 = arith.addf %19, %21 : vector<16x128xf32>
    %c8_21 = arith.constant 8 : index
    %c0_22 = arith.constant 0 : index
    %23 = vector.load %arg23[%c8_21, %c0_22] : memref<24x128xf32, #tpu.memory_space<vmem>>, vector<16x128xf32>
    tpu.vector_store %arg23[%c8_21, %c0_22], %15 {strides = array<i32>} : memref<24x128xf32, #tpu.memory_space<vmem>>, vector<16x128xf32>,
    %c7_23 = arith.constant 7 : index
    %c0_24 = arith.constant 0 : index
    %24 = vector.load %arg23[%c7_23, %c0_24] : memref<24x128xf32, #tpu.memory_space<vmem>>, vector<16x128xf32>
    %c8_25 = arith.constant 8 : index
    %c0_26 = arith.constant 0 : index
    %25 = vector.load %arg23[%c8_25, %c0_26] : memref<24x128xf32, #tpu.memory_space<vmem>>, vector<16x128xf32>
    %26 = tpu.concatenate %24, %25 in 1 : vector<16x128xf32>, vector<16x128xf32> -> vector<16x256xf32>
    %27 = arith.truncf %26 : vector<16x256xf32> to vector<16x256xbf16>
    %c0_27 = arith.constant 0 : index
    %c0_28 = arith.constant 0 : index
    %28 = vector.load %arg4[%c0_27, %c0_28] : memref<256x256xbf16, #tpu.memory_space<vmem>>, vector<256x256xbf16>
    %cst_29 = arith.constant dense<0.000000e+00> : vector<16x256xf32>
    %29 = tpu.matmul %27, %28, %cst_29 {dimension_numbers = #tpu.dot_dimension_numbers<[1], [0], [0], [1], [0, 0, 1, 1], [], []>} : vector<16x256xbf16>, vector<256x256xbf16>, vector<16x256xf32> -> vector<16x256xf32>
    %c0_30 = arith.constant 0 : index
    %c0_31 = arith.constant 0 : index
    %30 = vector.load %arg5[%c0_30, %c0_31] : memref<1x256xf32, #tpu.memory_space<vmem>>, vector<1x256xf32>
    %31 = vector.broadcast %30 : vector<1x256xf32> to vector<16x256xf32>
    %32 = arith.addf %29, %31 : vector<16x256xf32>
    %33 = vector.extract_strided_slice %32 {offsets = [0, 0], sizes = [16, 128], strides = [1, 1]} : vector<16x256xf32> to vector<16x128xf32>
    %34 = math.tanh %33 : vector<16x128xf32>
    %35 = vector.extract_strided_slice %32 {offsets = [0, 128], sizes = [16, 128], strides = [1, 1]} : vector<16x256xf32> to vector<16x128xf32>
    %36 = arith.negf %35 : vector<16x128xf32>
    %37 = math.exp %36 : vector<16x128xf32>
    %cst_32 = arith.constant 1.000000e+00 : f32
    %38 = vector.broadcast %cst_32 : f32 to vector<16x128xf32>
    %39 = arith.addf %38, %37 : vector<16x128xf32>
    %40 = arith.divf %38, %39 : vector<16x128xf32>
    %41 = arith.mulf %34, %40 : vector<16x128xf32>
    %42 = arith.addf %41, %22 : vector<16x128xf32>
    %cst_33 = arith.constant 0.000000e+00 : f32
    %43 = vector.broadcast %cst_33 : f32 to vector<16x128xf32>
    %44 = arith.maximumf %42, %43 : vector<16x128xf32>
    %c8_34 = arith.constant 8 : index
    %c0_35 = arith.constant 0 : index
    %45 = vector.load %arg23[%c8_34, %c0_35] : memref<24x128xf32, #tpu.memory_space<vmem>>, vector<16x128xf32>
    tpu.vector_store %arg23[%c8_34, %c0_35], %44 {strides = array<i32>} : memref<24x128xf32, #tpu.memory_space<vmem>>, vector<16x128xf32>,
    %c6 = arith.constant 6 : index
    %c0_36 = arith.constant 0 : index
    %46 = vector.load %arg23[%c6, %c0_36] : memref<24x128xf32, #tpu.memory_space<vmem>>, vector<16x128xf32>
    %c8_37 = arith.constant 8 : index
    %c0_38 = arith.constant 0 : index
    %47 = vector.load %arg23[%c8_37, %c0_38] : memref<24x128xf32, #tpu.memory_space<vmem>>, vector<16x128xf32>
    %48 = tpu.concatenate %46, %47 in 1 : vector<16x128xf32>, vector<16x128xf32> -> vector<16x256xf32>
    %49 = arith.truncf %48 : vector<16x256xf32> to vector<16x256xbf16>
    %c0_39 = arith.constant 0 : index
    %c0_40 = arith.constant 0 : index
    %50 = vector.load %arg8[%c0_39, %c0_40] : memref<256x128xbf16, #tpu.memory_space<vmem>>, vector<256x128xbf16>
    %cst_41 = arith.constant dense<0.000000e+00> : vector<16x128xf32>
    %51 = tpu.matmul %49, %50, %cst_41 {dimension_numbers = #tpu.dot_dimension_numbers<[1], [0], [0], [1], [0, 0, 1, 1], [], []>} : vector<16x256xbf16>, vector<256x128xbf16>, vector<16x128xf32> -> vector<16x128xf32>
    %c0_42 = arith.constant 0 : index
    %c0_43 = arith.constant 0 : index
    %52 = vector.load %arg9[%c0_42, %c0_43] : memref<1x128xf32, #tpu.memory_space<vmem>>, vector<1x128xf32>
    %53 = vector.broadcast %52 : vector<1x128xf32> to vector<16x128xf32>
    %54 = arith.addf %51, %53 : vector<16x128xf32>
    %cst_44 = arith.constant 0.000000e+00 : f32
    %55 = vector.broadcast %cst_44 : f32 to vector<16x128xf32>
    %56 = arith.maximumf %54, %55 : vector<16x128xf32>
    %c8_45 = arith.constant 8 : index
    %c0_46 = arith.constant 0 : index
    %57 = vector.load %arg23[%c8_45, %c0_46] : memref<24x128xf32, #tpu.memory_space<vmem>>, vector<16x128xf32>
    %58 = arith.truncf %57 : vector<16x128xf32> to vector<16x128xbf16>
    %c0_47 = arith.constant 0 : index
    %c0_48 = arith.constant 0 : index
    %59 = vector.load %arg12[%c0_47, %c0_48] : memref<128x128xbf16, #tpu.memory_space<vmem>>, vector<128x128xbf16>
    %cst_49 = arith.constant dense<0.000000e+00> : vector<16x128xf32>
    %60 = tpu.matmul %58, %59, %cst_49 {dimension_numbers = #tpu.dot_dimension_numbers<[1], [0], [0], [1], [0, 0, 1, 1], [], []>} : vector<16x128xbf16>, vector<128x128xbf16>, vector<16x128xf32> -> vector<16x128xf32>
    %c0_50 = arith.constant 0 : index
    %c0_51 = arith.constant 0 : index
    %61 = vector.load %arg13[%c0_50, %c0_51] : memref<1x128xf32, #tpu.memory_space<vmem>>, vector<1x128xf32>
    %62 = vector.broadcast %61 : vector<1x128xf32> to vector<16x128xf32>
    %63 = arith.addf %60, %62 : vector<16x128xf32>
    %c8_52 = arith.constant 8 : index
    %c0_53 = arith.constant 0 : index
    %64 = vector.load %arg23[%c8_52, %c0_53] : memref<24x128xf32, #tpu.memory_space<vmem>>, vector<16x128xf32>
    tpu.vector_store %arg23[%c8_52, %c0_53], %56 {strides = array<i32>} : memref<24x128xf32, #tpu.memory_space<vmem>>, vector<16x128xf32>,
    %c6_54 = arith.constant 6 : index
    %c0_55 = arith.constant 0 : index
    %65 = vector.load %arg23[%c6_54, %c0_55] : memref<24x128xf32, #tpu.memory_space<vmem>>, vector<16x128xf32>
    %c8_56 = arith.constant 8 : index
    %c0_57 = arith.constant 0 : index
    %66 = vector.load %arg23[%c8_56, %c0_57] : memref<24x128xf32, #tpu.memory_space<vmem>>, vector<16x128xf32>
    %67 = tpu.concatenate %65, %66 in 1 : vector<16x128xf32>, vector<16x128xf32> -> vector<16x256xf32>
    %68 = arith.truncf %67 : vector<16x256xf32> to vector<16x256xbf16>
    %c0_58 = arith.constant 0 : index
    %c0_59 = arith.constant 0 : index
    %69 = vector.load %arg10[%c0_58, %c0_59] : memref<256x256xbf16, #tpu.memory_space<vmem>>, vector<256x256xbf16>
    %cst_60 = arith.constant dense<0.000000e+00> : vector<16x256xf32>
    %70 = tpu.matmul %68, %69, %cst_60 {dimension_numbers = #tpu.dot_dimension_numbers<[1], [0], [0], [1], [0, 0, 1, 1], [], []>} : vector<16x256xbf16>, vector<256x256xbf16>, vector<16x256xf32> -> vector<16x256xf32>
    %c0_61 = arith.constant 0 : index
    %c0_62 = arith.constant 0 : index
    %71 = vector.load %arg11[%c0_61, %c0_62] : memref<1x256xf32, #tpu.memory_space<vmem>>, vector<1x256xf32>
    %72 = vector.broadcast %71 : vector<1x256xf32> to vector<16x256xf32>
    %73 = arith.addf %70, %72 : vector<16x256xf32>
    %74 = vector.extract_strided_slice %73 {offsets = [0, 0], sizes = [16, 128], strides = [1, 1]} : vector<16x256xf32> to vector<16x128xf32>
    %75 = math.tanh %74 : vector<16x128xf32>
    %76 = vector.extract_strided_slice %73 {offsets = [0, 128], sizes = [16, 128], strides = [1, 1]} : vector<16x256xf32> to vector<16x128xf32>
    %77 = arith.negf %76 : vector<16x128xf32>
    %78 = math.exp %77 : vector<16x128xf32>
    %cst_63 = arith.constant 1.000000e+00 : f32
    %79 = vector.broadcast %cst_63 : f32 to vector<16x128xf32>
    %80 = arith.addf %79, %78 : vector<16x128xf32>
    %81 = arith.divf %79, %80 : vector<16x128xf32>
    %82 = arith.mulf %75, %81 : vector<16x128xf32>
    %83 = arith.addf %82, %63 : vector<16x128xf32>
    %cst_64 = arith.constant 0.000000e+00 : f32
    %84 = vector.broadcast %cst_64 : f32 to vector<16x128xf32>
    %85 = arith.maximumf %83, %84 : vector<16x128xf32>
    %c8_65 = arith.constant 8 : index
    %c0_66 = arith.constant 0 : index
    %86 = vector.load %arg23[%c8_65, %c0_66] : memref<24x128xf32, #tpu.memory_space<vmem>>, vector<16x128xf32>
    tpu.vector_store %arg23[%c8_65, %c0_66], %85 {strides = array<i32>} : memref<24x128xf32, #tpu.memory_space<vmem>>, vector<16x128xf32>,
    %c4 = arith.constant 4 : index
    %c0_67 = arith.constant 0 : index
    %87 = vector.load %arg23[%c4, %c0_67] : memref<24x128xf32, #tpu.memory_space<vmem>>, vector<16x128xf32>
    %c8_68 = arith.constant 8 : index
    %c0_69 = arith.constant 0 : index
    %88 = vector.load %arg23[%c8_68, %c0_69] : memref<24x128xf32, #tpu.memory_space<vmem>>, vector<16x128xf32>
    %89 = tpu.concatenate %87, %88 in 1 : vector<16x128xf32>, vector<16x128xf32> -> vector<16x256xf32>
    %90 = arith.truncf %89 : vector<16x256xf32> to vector<16x256xbf16>
    %c0_70 = arith.constant 0 : index
    %c0_71 = arith.constant 0 : index
    %91 = vector.load %arg14[%c0_70, %c0_71] : memref<256x128xbf16, #tpu.memory_space<vmem>>, vector<256x128xbf16>
    %cst_72 = arith.constant dense<0.000000e+00> : vector<16x128xf32>
    %92 = tpu.matmul %90, %91, %cst_72 {dimension_numbers = #tpu.dot_dimension_numbers<[1], [0], [0], [1], [0, 0, 1, 1], [], []>} : vector<16x256xbf16>, vector<256x128xbf16>, vector<16x128xf32> -> vector<16x128xf32>
    %c0_73 = arith.constant 0 : index
    %c0_74 = arith.constant 0 : index
    %93 = vector.load %arg15[%c0_73, %c0_74] : memref<1x128xf32, #tpu.memory_space<vmem>>, vector<1x128xf32>
    %94 = vector.broadcast %93 : vector<1x128xf32> to vector<16x128xf32>
    %95 = arith.addf %92, %94 : vector<16x128xf32>
    %cst_75 = arith.constant 0.000000e+00 : f32
    %96 = vector.broadcast %cst_75 : f32 to vector<16x128xf32>
    %97 = arith.maximumf %95, %96 : vector<16x128xf32>
    %c8_76 = arith.constant 8 : index
    %c0_77 = arith.constant 0 : index
    %98 = vector.load %arg23[%c8_76, %c0_77] : memref<24x128xf32, #tpu.memory_space<vmem>>, vector<16x128xf32>
    %99 = arith.truncf %98 : vector<16x128xf32> to vector<16x128xbf16>
    %c0_78 = arith.constant 0 : index
    %c0_79 = arith.constant 0 : index
    %100 = vector.load %arg18[%c0_78, %c0_79] : memref<128x128xbf16, #tpu.memory_space<vmem>>, vector<128x128xbf16>
    %cst_80 = arith.constant dense<0.000000e+00> : vector<16x128xf32>
    %101 = tpu.matmul %99, %100, %cst_80 {dimension_numbers = #tpu.dot_dimension_numbers<[1], [0], [0], [1], [0, 0, 1, 1], [], []>} : vector<16x128xbf16>, vector<128x128xbf16>, vector<16x128xf32> -> vector<16x128xf32>
    %c0_81 = arith.constant 0 : index
    %c0_82 = arith.constant 0 : index
    %102 = vector.load %arg19[%c0_81, %c0_82] : memref<1x128xf32, #tpu.memory_space<vmem>>, vector<1x128xf32>
    %103 = vector.broadcast %102 : vector<1x128xf32> to vector<16x128xf32>
    %104 = arith.addf %101, %103 : vector<16x128xf32>
    %c8_83 = arith.constant 8 : index
    %c0_84 = arith.constant 0 : index
    %105 = vector.load %arg23[%c8_83, %c0_84] : memref<24x128xf32, #tpu.memory_space<vmem>>, vector<16x128xf32>
    tpu.vector_store %arg23[%c8_83, %c0_84], %97 {strides = array<i32>} : memref<24x128xf32, #tpu.memory_space<vmem>>, vector<16x128xf32>,
    %c4_85 = arith.constant 4 : index
    %c0_86 = arith.constant 0 : index
    %106 = vector.load %arg23[%c4_85, %c0_86] : memref<24x128xf32, #tpu.memory_space<vmem>>, vector<16x128xf32>
    %c8_87 = arith.constant 8 : index
    %c0_88 = arith.constant 0 : index
    %107 = vector.load %arg23[%c8_87, %c0_88] : memref<24x128xf32, #tpu.memory_space<vmem>>, vector<16x128xf32>
    %108 = tpu.concatenate %106, %107 in 1 : vector<16x128xf32>, vector<16x128xf32> -> vector<16x256xf32>
    %109 = arith.truncf %108 : vector<16x256xf32> to vector<16x256xbf16>
    %c0_89 = arith.constant 0 : index
    %c0_90 = arith.constant 0 : index
    %110 = vector.load %arg16[%c0_89, %c0_90] : memref<256x256xbf16, #tpu.memory_space<vmem>>, vector<256x256xbf16>
    %cst_91 = arith.constant dense<0.000000e+00> : vector<16x256xf32>
    %111 = tpu.matmul %109, %110, %cst_91 {dimension_numbers = #tpu.dot_dimension_numbers<[1], [0], [0], [1], [0, 0, 1, 1], [], []>} : vector<16x256xbf16>, vector<256x256xbf16>, vector<16x256xf32> -> vector<16x256xf32>
    %c0_92 = arith.constant 0 : index
    %c0_93 = arith.constant 0 : index
    %112 = vector.load %arg17[%c0_92, %c0_93] : memref<1x256xf32, #tpu.memory_space<vmem>>, vector<1x256xf32>
    %113 = vector.broadcast %112 : vector<1x256xf32> to vector<16x256xf32>
    %114 = arith.addf %111, %113 : vector<16x256xf32>
    %115 = vector.extract_strided_slice %114 {offsets = [0, 0], sizes = [16, 128], strides = [1, 1]} : vector<16x256xf32> to vector<16x128xf32>
    %116 = math.tanh %115 : vector<16x128xf32>
    %117 = vector.extract_strided_slice %114 {offsets = [0, 128], sizes = [16, 128], strides = [1, 1]} : vector<16x256xf32> to vector<16x128xf32>
    %118 = arith.negf %117 : vector<16x128xf32>
    %119 = math.exp %118 : vector<16x128xf32>
    %cst_94 = arith.constant 1.000000e+00 : f32
    %120 = vector.broadcast %cst_94 : f32 to vector<16x128xf32>
    %121 = arith.addf %120, %119 : vector<16x128xf32>
    %122 = arith.divf %120, %121 : vector<16x128xf32>
    %123 = arith.mulf %116, %122 : vector<16x128xf32>
    %124 = arith.addf %123, %104 : vector<16x128xf32>
    %cst_95 = arith.constant 0.000000e+00 : f32
    %125 = vector.broadcast %cst_95 : f32 to vector<16x128xf32>
    %126 = arith.maximumf %124, %125 : vector<16x128xf32>
    %c8_96 = arith.constant 8 : index
    %c0_97 = arith.constant 0 : index
    %127 = vector.load %arg23[%c8_96, %c0_97] : memref<24x128xf32, #tpu.memory_space<vmem>>, vector<16x128xf32>
    tpu.vector_store %arg23[%c8_96, %c0_97], %126 {strides = array<i32>} : memref<24x128xf32, #tpu.memory_space<vmem>>, vector<16x128xf32>,
    %c8_98 = arith.constant 8 : index
    %c0_99 = arith.constant 0 : index
    %128 = vector.load %arg23[%c8_98, %c0_99] : memref<24x128xf32, #tpu.memory_space<vmem>>, vector<16x128xf32>
    %129 = arith.truncf %128 : vector<16x128xf32> to vector<16x128xbf16>
    %c0_100 = arith.constant 0 : index
    %c0_101 = arith.constant 0 : index
    %130 = vector.load %arg20[%c0_100, %c0_101] : memref<128x8xbf16, #tpu.memory_space<vmem>>, vector<128x8xbf16>
    %cst_102 = arith.constant dense<0.000000e+00> : vector<16x8xf32>
    %131 = tpu.matmul %129, %130, %cst_102 {dimension_numbers = #tpu.dot_dimension_numbers<[1], [0], [0], [1], [0, 0, 1, 1], [], []>} : vector<16x128xbf16>, vector<128x8xbf16>, vector<16x8xf32> -> vector<16x8xf32>
    %c0_103 = arith.constant 0 : index
    %c0_104 = arith.constant 0 : index
    %132 = vector.load %arg21[%c0_103, %c0_104] : memref<1x8xf32, #tpu.memory_space<vmem>>, vector<1x8xf32>
    %133 = vector.broadcast %132 : vector<1x8xf32> to vector<16x8xf32>
    %134 = arith.addf %131, %133 : vector<16x8xf32>
    %c0_105 = arith.constant 0 : index
    %c0_106 = arith.constant 0 : index
    %c0_107 = arith.constant 0 : index
    %135 = vector.load %arg22[%c0_105, %c0_106, %c0_107] : memref<1x16x8xf32, #tpu.memory_space<vmem>>, vector<1x16x8xf32>
    %136 = vector.shape_cast %135 : vector<1x16x8xf32> to vector<16x8xf32>
    %137 = vector.shape_cast %134 : vector<16x8xf32> to vector<1x16x8xf32>
    tpu.vector_store %arg22[%c0_105, %c0_106, %c0_107], %137 {strides = array<i32>} : memref<1x16x8xf32, #tpu.memory_space<vmem>>, vector<1x16x8xf32>,
    return
  }
  func.func @transform_0(%arg0: i32) -> (i32, i32, i32) {
    %c0_i32 = arith.constant 0 : i32
    %c0_i32_0 = arith.constant 0 : i32
    %c0_i32_1 = arith.constant 0 : i32
    return %arg0, %c0_i32, %c0_i32_0 : i32, i32, i32
  }
  func.func @transform_1(%arg0: i32) -> (i32, i32) {
    %c0_i32 = arith.constant 0 : i32
    %c0_i32_0 = arith.constant 0 : i32
    %c0_i32_1 = arith.constant 0 : i32
    return %c0_i32, %c0_i32_0 : i32, i32
  }
  func.func @transform_2(%arg0: i32) -> (i32, i32) {
    %c0_i32 = arith.constant 0 : i32
    %c0_i32_0 = arith.constant 0 : i32
    %c0_i32_1 = arith.constant 0 : i32
    return %c0_i32, %c0_i32_0 : i32, i32
  }
  func.func @transform_3(%arg0: i32) -> (i32, i32) {
    %c0_i32 = arith.constant 0 : i32
    %c0_i32_0 = arith.constant 0 : i32
    %c0_i32_1 = arith.constant 0 : i32
    return %c0_i32, %c0_i32_0 : i32, i32
  }
  func.func @transform_4(%arg0: i32) -> (i32, i32) {
    %c0_i32 = arith.constant 0 : i32
    %c0_i32_0 = arith.constant 0 : i32
    %c0_i32_1 = arith.constant 0 : i32
    return %c0_i32, %c0_i32_0 : i32, i32
  }
  func.func @transform_5(%arg0: i32) -> (i32, i32) {
    %c0_i32 = arith.constant 0 : i32
    %c0_i32_0 = arith.constant 0 : i32
    %c0_i32_1 = arith.constant 0 : i32
    return %c0_i32, %c0_i32_0 : i32, i32
  }
  func.func @transform_6(%arg0: i32) -> (i32, i32) {
    %c0_i32 = arith.constant 0 : i32
    %c0_i32_0 = arith.constant 0 : i32
    %c0_i32_1 = arith.constant 0 : i32
    return %c0_i32, %c0_i32_0 : i32, i32
  }
  func.func @transform_7(%arg0: i32) -> (i32, i32) {
    %c0_i32 = arith.constant 0 : i32
    %c0_i32_0 = arith.constant 0 : i32
    %c0_i32_1 = arith.constant 0 : i32
    return %c0_i32, %c0_i32_0 : i32, i32
  }
  func.func @transform_8(%arg0: i32) -> (i32, i32) {
    %c0_i32 = arith.constant 0 : i32
    %c0_i32_0 = arith.constant 0 : i32
    %c0_i32_1 = arith.constant 0 : i32
    return %c0_i32, %c0_i32_0 : i32, i32
  }
  func.func @transform_9(%arg0: i32) -> (i32, i32) {
    %c0_i32 = arith.constant 0 : i32
    %c0_i32_0 = arith.constant 0 : i32
    %c0_i32_1 = arith.constant 0 : i32
    return %c0_i32, %c0_i32_0 : i32, i32
  }
  func.func @transform_10(%arg0: i32) -> (i32, i32) {
    %c0_i32 = arith.constant 0 : i32
    %c0_i32_0 = arith.constant 0 : i32
    %c0_i32_1 = arith.constant 0 : i32
    return %c0_i32, %c0_i32_0 : i32, i32
  }
  func.func @transform_11(%arg0: i32) -> (i32, i32) {
    %c0_i32 = arith.constant 0 : i32
    %c0_i32_0 = arith.constant 0 : i32
    %c0_i32_1 = arith.constant 0 : i32
    return %c0_i32, %c0_i32_0 : i32, i32
  }
  func.func @transform_12(%arg0: i32) -> (i32, i32) {
    %c0_i32 = arith.constant 0 : i32
    %c0_i32_0 = arith.constant 0 : i32
    %c0_i32_1 = arith.constant 0 : i32
    return %c0_i32, %c0_i32_0 : i32, i32
  }
  func.func @transform_13(%arg0: i32) -> (i32, i32) {
    %c0_i32 = arith.constant 0 : i32
    %c0_i32_0 = arith.constant 0 : i32
    %c0_i32_1 = arith.constant 0 : i32
    return %c0_i32, %c0_i32_0 : i32, i32
  }
  func.func @transform_14(%arg0: i32) -> (i32, i32) {
    %c0_i32 = arith.constant 0 : i32
    %c0_i32_0 = arith.constant 0 : i32
    %c0_i32_1 = arith.constant 0 : i32
    return %c0_i32, %c0_i32_0 : i32, i32
  }
  func.func @transform_15(%arg0: i32) -> (i32, i32) {
    %c0_i32 = arith.constant 0 : i32
    %c0_i32_0 = arith.constant 0 : i32
    %c0_i32_1 = arith.constant 0 : i32
    return %c0_i32, %c0_i32_0 : i32, i32
  }
  func.func @transform_16(%arg0: i32) -> (i32, i32) {
    %c0_i32 = arith.constant 0 : i32
    %c0_i32_0 = arith.constant 0 : i32
    %c0_i32_1 = arith.constant 0 : i32
    return %c0_i32, %c0_i32_0 : i32, i32
  }
  func.func @transform_17(%arg0: i32) -> (i32, i32) {
    %c0_i32 = arith.constant 0 : i32
    %c0_i32_0 = arith.constant 0 : i32
    %c0_i32_1 = arith.constant 0 : i32
    return %c0_i32, %c0_i32_0 : i32, i32
  }
  func.func @transform_18(%arg0: i32) -> (i32, i32) {
    %c0_i32 = arith.constant 0 : i32
    %c0_i32_0 = arith.constant 0 : i32
    %c0_i32_1 = arith.constant 0 : i32
    return %c0_i32, %c0_i32_0 : i32, i32
  }
  func.func @transform_19(%arg0: i32) -> (i32, i32) {
    %c0_i32 = arith.constant 0 : i32
    %c0_i32_0 = arith.constant 0 : i32
    %c0_i32_1 = arith.constant 0 : i32
    return %c0_i32, %c0_i32_0 : i32, i32
  }
  func.func @transform_20(%arg0: i32) -> (i32, i32) {
    %c0_i32 = arith.constant 0 : i32
    %c0_i32_0 = arith.constant 0 : i32
    %c0_i32_1 = arith.constant 0 : i32
    return %c0_i32, %c0_i32_0 : i32, i32
  }
  func.func @transform_21(%arg0: i32) -> (i32, i32, i32) {
    %c0_i32 = arith.constant 0 : i32
    %c0_i32_0 = arith.constant 0 : i32
    %c0_i32_1 = arith.constant 0 : i32
    return %arg0, %c0_i32, %c0_i32_0 : i32, i32, i32
  }
}

</mosaic_0001>

<llo_original>
// kernel: tpu_custom_call.1
$region0: #{tpu_custom_call.1}
  #allocation0 [shape = 'u32[]', space=smem, size = 0x4, offset = 0x4, fixed_abs, tag = 'smem constant byte address 0x4 - core index']
  #allocation1 [shape = 'u32[144,128]{1,0:T(1,128)}', space=vmem, size = 0x12000, scoped, tag = 'internal scratch']
  #allocation2 [shape = 'f32[24,128]{1,0:T(8,128)}', space=vmem, size = 0x3000, scoped, tag = 'scratch operand']
  %s0 = inlined_call_operand.vmem [shape: f32[2,16,4], index: 0, kind: input, shape index: {}]
  %s1 = inlined_call_operand.hbm [shape: bf16[256,128], index: 1, kind: input, shape index: {}]
  %s2 = inlined_call_operand.vmem [shape: f32[1,128], index: 2, kind: input, shape index: {}]
  %s3 = inlined_call_operand.hbm [shape: bf16[256,256], index: 3, kind: input, shape index: {}]
  %s4 = inlined_call_operand.hbm [shape: f32[1,256], index: 4, kind: input, shape index: {}]
  %s5 = inlined_call_operand.hbm [shape: bf16[128,128], index: 5, kind: input, shape index: {}]
  %s6 = inlined_call_operand.hbm [shape: f32[1,128], index: 6, kind: input, shape index: {}]
  %s7 = inlined_call_operand.hbm [shape: bf16[256,128], index: 7, kind: input, shape index: {}]
  %s8 = inlined_call_operand.hbm [shape: f32[1,128], index: 8, kind: input, shape index: {}]
  %s9 = inlined_call_operand.hbm [shape: bf16[256,256], index: 9, kind: input, shape index: {}]
  %s10 = inlined_call_operand.hbm [shape: f32[1,256], index: 10, kind: input, shape index: {}]
  %s11 = inlined_call_operand.hbm [shape: bf16[128,128], index: 11, kind: input, shape index: {}]
  %s12 = inlined_call_operand.hbm [shape: f32[1,128], index: 12, kind: input, shape index: {}]
  %s13 = inlined_call_operand.vmem [shape: bf16[256,128], index: 13, kind: input, shape index: {}]
  %s14 = inlined_call_operand.hbm [shape: f32[1,128], index: 14, kind: input, shape index: {}]
  %s15 = inlined_call_operand.hbm [shape: bf16[256,256], index: 15, kind: input, shape index: {}]
  %s16 = inlined_call_operand.vmem [shape: f32[1,256], index: 16, kind: input, shape index: {}]
  %s17 = inlined_call_operand.hbm [shape: bf16[128,128], index: 17, kind: input, shape index: {}]
  %s18 = inlined_call_operand.vmem [shape: f32[1,128], index: 18, kind: input, shape index: {}]
  %s19 = inlined_call_operand.vmem [shape: bf16[128,8], index: 19, kind: input, shape index: {}]
  %s20 = inlined_call_operand.vmem [shape: f32[1,8], index: 20, kind: input, shape index: {}]
  %s21 = inlined_call_operand.vmem [shape: f32[2,16,8], index: 21, kind: output, shape index: {}]
  %s22 = sld [smem:[#allocation0]]
  $region173: #{tpu_custom_call.1} parent=0
    _
  %s24 = ssub.s32 1, %s22
  %s25 = scalar_select 0, %s24, %s22
  $region1: #{tpu_custom_call.1} parent=0
    #allocation3 [shape = 'u8[65536]{0}', space=vmem, size = 0x10000, scoped, tag = 'input window, operand 1, single buffered']
    #allocation4 [shape = 's32[2]{0}', space=sflag, size = 0x8, scoped, tag = 'scoped memory for tpu_custom_call.1']
    #allocation5 [shape = 'u8[131072]{0}', space=vmem, size = 0x20000, scoped, tag = 'input window, operand 3, single buffered']
    #allocation6 [shape = 's32[1]{0}', space=sflag, size = 0x4, scoped, tag = 'scoped memory for tpu_custom_call.1']
    #allocation7 [shape = 'u8[1024]{0}', space=vmem, size = 0x400, scoped, tag = 'input window, operand 4, single buffered']
    #allocation8 [shape = 'u8[32768]{0}', space=vmem, size = 0x8000, scoped, tag = 'input window, operand 5, single buffered']
    #allocation9 [shape = 's32[1]{0}', space=sflag, size = 0x4, scoped, tag = 'scoped memory for tpu_custom_call.1']
    #allocation10 [shape = 'u8[512]{0}', space=vmem, size = 0x400, scoped, tag = 'input window, operand 6, single buffered']
    #allocation11 [shape = 'u8[65536]{0}', space=vmem, size = 0x10000, scoped, tag = 'input window, operand 7, single buffered']
    #allocation12 [shape = 's32[1]{0}', space=sflag, size = 0x4, scoped, tag = 'scoped memory for tpu_custom_call.1']
    #allocation13 [shape = 'u8[512]{0}', space=vmem, size = 0x400, scoped, tag = 'input window, operand 8, single buffered']
    #allocation14 [shape = 'u8[131072]{0}', space=vmem, size = 0x20000, scoped, tag = 'input window, operand 9, single buffered']
    #allocation15 [shape = 's32[1]{0}', space=sflag, size = 0x4, scoped, tag = 'scoped memory for tpu_custom_call.1']
    #allocation16 [shape = 'u8[1024]{0}', space=vmem, size = 0x400, scoped, tag = 'input window, operand 10, single buffered']
    #allocation17 [shape = 'u8[32768]{0}', space=vmem, size = 0x8000, scoped, tag = 'input window, operand 11, single buffered']
    #allocation18 [shape = 's32[1]{0}', space=sflag, size = 0x4, scoped, tag = 'scoped memory for tpu_custom_call.1']
    #allocation19 [shape = 'u8[512]{0}', space=vmem, size = 0x400, scoped, tag = 'input window, operand 12, single buffered']
    #allocation20 [shape = 'u8[512]{0}', space=vmem, size = 0x400, scoped, tag = 'input window, operand 14, single buffered']
    #allocation21 [shape = 's32[1]{0}', space=sflag, size = 0x4, scoped, tag = 'scoped memory for tpu_custom_call.1']
    #allocation22 [shape = 'u8[131072]{0}', space=vmem, size = 0x20000, scoped, tag = 'input window, operand 15, single buffered']
    #allocation23 [shape = 'u8[32768]{0}', space=vmem, size = 0x8000, scoped, tag = 'input window, operand 17, single buffered']
    #allocation24 [shape = 's32[1]{0}', space=sflag, size = 0x4, scoped, tag = 'scoped memory for tpu_custom_call.1']
    %26 = vsyncpa [#allocation4], 0
    %27 = vsyncpa [#allocation6], 0
    %28 = vsyncpa [#allocation9], 0
    %29 = vsyncpa [#allocation12], 0
    %30 = vsyncpa [#allocation15], 0
    %31 = vsyncpa [#allocation18], 0
    %32 = vsyncpa [#allocation21], 0
    %33 = vsyncpa [#allocation24], 0
    loop: start=0, step=1, limit=4
    $region2: #{tpu_custom_call.1} parent=1 // loop_pre_header
      _
    $region3: #{tpu_custom_call.1} parent=1 // loop_header
      %s35 = sphi 0, %s39
      %p36 = scmp.ge.s32.totalorder %s35, 4
      %s45 = sphi 0, %s47
      %s48 = sphi 0, %s45
      %s49 = sphi 0, %s48
      %s65 = sphi 0, %s49
      %s69 = sphi 0, %s69
      %s71 = sphi 0, %s69
      %s72 = sphi 0, %s71
      %s86 = sphi 0, %s72
      %s90 = sphi 0, %s90
      %s92 = sphi 0, %s90
      %s93 = sphi 0, %s92
      %s107 = sphi 0, %s93
      %s111 = sphi 0, %s111
      %s113 = sphi 0, %s111
      %s114 = sphi 0, %s113
      %s128 = sphi 0, %s114
      %s132 = sphi 0, %s132
      %s134 = sphi 0, %s132
      %s135 = sphi 0, %s134
      %s149 = sphi 0, %s135
      %s153 = sphi 0, %s153
      %s155 = sphi 0, %s153
      %s156 = sphi 0, %s155
      %s170 = sphi 0, %s156
      %s174 = sphi 0, %s174
      %s176 = sphi 0, %s174
      %s177 = sphi 0, %s176
      %s191 = sphi 0, %s177
      %s195 = sphi 0, %s195
      %s197 = sphi 0, %s195
      %s198 = sphi 0, %s197
      %s212 = sphi 0, %s198
      %s216 = sphi 0, %s216
      %s218 = sphi 0, %s216
      %s219 = sphi 0, %s218
      %s233 = sphi 0, %s219
      %s237 = sphi 0, %s237
      %s239 = sphi 0, %s237
      %s240 = sphi 0, %s239
      %s254 = sphi 0, %s240
      %s258 = sphi 0, %s258
      %s260 = sphi 0, %s258
      %s261 = sphi 0, %s260
      %s275 = sphi 0, %s261
      %s279 = sphi 0, %s279
      %s281 = sphi 0, %s279
      %s282 = sphi 0, %s281
      %s296 = sphi 0, %s282
      %s300 = sphi 0, %s300
      %s302 = sphi 0, %s300
      %s303 = sphi 0, %s302
      %s317 = sphi 0, %s303
      %s321 = sphi 0, %s321
      %s323 = sphi 0, %s321
      %s324 = sphi 0, %s323
      %s338 = sphi 0, %s324
      %s342 = sphi 0, %s342
      %s344 = sphi 0, %s342
      %s345 = sphi 0, %s344
      %s359 = sphi 0, %s345
      %s363 = sphi 0, %s363
      %s365 = sphi 0, %s363
      %s366 = sphi 0, %s365
      %s380 = sphi 0, %s366
      %s384 = sphi 0, %s384
      %s386 = sphi 0, %s384
      %s387 = sphi 0, %s386
      %s401 = sphi 0, %s387
      %s405 = sphi 0, %s405
      %s407 = sphi 0, %s405
      %s408 = sphi 0, %s407
      %s422 = sphi 0, %s408
      %s426 = sphi 0, %s426
      %s428 = sphi 0, %s426
      %s429 = sphi 0, %s428
      %s443 = sphi 0, %s429
      %s447 = sphi 0, %s447
      %s449 = sphi 0, %s447
      %s450 = sphi 0, %s449
      %s464 = sphi 0, %s450
      %s468 = sphi 0, %s468
      %s470 = sphi 0, %s468
      %s471 = sphi 0, %s470
      %s485 = sphi 0, %s471
      %s491 = sphi 0, %s493
      %s494 = sphi 0, %s491
      %s495 = sphi 0, %s494
      %s511 = sphi 0, %s495
    $region4: #{tpu_custom_call.1} parent=1 // loop_header_branch
      %38 = sbr.rel (%p36) target = $region8
    $region5: #{tpu_custom_call.1} parent=1 // loop_body
      %s40 = ssub.s32 %s35, 1
      %s41 = ssub.s32 %s35, 2
      %s42 = sadd.s32 %s35, 1
      %s43 = ssub.s32 %s35, %s42
      %p44 = scmp.eq.s32.totalorder %s43, 0
      %s46 = sadd.s32 %s45, 1
      %s47 = scalar_select %p44, %s45, %s46
      %p50 = pneg %p44
      %p51 = scmp.eq.s32.totalorder %s35, 1
      %p52 = por %p50, %p51
      %p53 = scmp.ne.s32.totalorder %s45, %s48
      %p54 = scmp.eq.s32.totalorder %s35, 0
      %p55 = por %p53, %p54
      %p56 = scmp.ne.s32.totalorder %s45, %s48
      %p57 = scmp.eq.s32.totalorder %s40, 1
      %p58 = por %p56, %p57
      %p59 = scmp.ne.s32.totalorder %s48, %s49
      %p60 = scmp.eq.s32.totalorder %s40, 0
      %p61 = por %p59, %p60
      %p62 = scmp.ne.s32.totalorder %s48, %s49
      %p63 = scmp.eq.s32.totalorder %s41, 1
      %p64 = por %p62, %p63
      %p66 = scmp.ne.s32.totalorder %s49, %s65
      %p67 = scmp.eq.s32.totalorder %s41, 0
      %p68 = por %p66, %p67
      %s70 = sadd.s32 %s69, 1
      %p73 = scmp.eq.s32.totalorder %s35, 1
      %p74 = scmp.ne.s32.totalorder %s69, %s71
      %p75 = scmp.eq.s32.totalorder %s35, 0
      %p76 = por %p74, %p75
      %p77 = scmp.ne.s32.totalorder %s69, %s71
      %p78 = scmp.eq.s32.totalorder %s40, 1
      %p79 = por %p77, %p78
      %p80 = scmp.ne.s32.totalorder %s71, %s72
      %p81 = scmp.eq.s32.totalorder %s40, 0
      %p82 = por %p80, %p81
      %p83 = scmp.ne.s32.totalorder %s71, %s72
      %p84 = scmp.eq.s32.totalorder %s41, 1
      %p85 = por %p83, %p84
      %p87 = scmp.ne.s32.totalorder %s72, %s86
      %p88 = scmp.eq.s32.totalorder %s41, 0
      %p89 = por %p87, %p88
      %s91 = sadd.s32 %s90, 1
      %p94 = scmp.eq.s32.totalorder %s35, 1
      %p95 = scmp.ne.s32.totalorder %s90, %s92
      %p96 = scmp.eq.s32.totalorder %s35, 0
      %p97 = por %p95, %p96
      %p98 = scmp.ne.s32.totalorder %s90, %s92
      %p99 = scmp.eq.s32.totalorder %s40, 1
      %p100 = por %p98, %p99
      %p101 = scmp.ne.s32.totalorder %s92, %s93
      %p102 = scmp.eq.s32.totalorder %s40, 0
      %p103 = por %p101, %p102
      %p104 = scmp.ne.s32.totalorder %s92, %s93
      %p105 = scmp.eq.s32.totalorder %s41, 1
      %p106 = por %p104, %p105
      %p108 = scmp.ne.s32.totalorder %s93, %s107
      %p109 = scmp.eq.s32.totalorder %s41, 0
      %p110 = por %p108, %p109
      %s112 = sadd.s32 %s111, 1
      %p115 = scmp.eq.s32.totalorder %s35, 1
      %p116 = scmp.ne.s32.totalorder %s111, %s113
      %p117 = scmp.eq.s32.totalorder %s35, 0
      %p118 = por %p116, %p117
      %p119 = scmp.ne.s32.totalorder %s111, %s113
      %p120 = scmp.eq.s32.totalorder %s40, 1
      %p121 = por %p119, %p120
      %p122 = scmp.ne.s32.totalorder %s113, %s114
      %p123 = scmp.eq.s32.totalorder %s40, 0
      %p124 = por %p122, %p123
      %p125 = scmp.ne.s32.totalorder %s113, %s114
      %p126 = scmp.eq.s32.totalorder %s41, 1
      %p127 = por %p125, %p126
      %p129 = scmp.ne.s32.totalorder %s114, %s128
      %p130 = scmp.eq.s32.totalorder %s41, 0
      %p131 = por %p129, %p130
      %s133 = sadd.s32 %s132, 1
      %p136 = scmp.eq.s32.totalorder %s35, 1
      %p137 = scmp.ne.s32.totalorder %s132, %s134
      %p138 = scmp.eq.s32.totalorder %s35, 0
      %p139 = por %p137, %p138
      %p140 = scmp.ne.s32.totalorder %s132, %s134
      %p141 = scmp.eq.s32.totalorder %s40, 1
      %p142 = por %p140, %p141
      %p143 = scmp.ne.s32.totalorder %s134, %s135
      %p144 = scmp.eq.s32.totalorder %s40, 0
      %p145 = por %p143, %p144
      %p146 = scmp.ne.s32.totalorder %s134, %s135
      %p147 = scmp.eq.s32.totalorder %s41, 1
      %p148 = por %p146, %p147
      %p150 = scmp.ne.s32.totalorder %s135, %s149
      %p151 = scmp.eq.s32.totalorder %s41, 0
      %p152 = por %p150, %p151
      %s154 = sadd.s32 %s153, 1
      %p157 = scmp.eq.s32.totalorder %s35, 1
      %p158 = scmp.ne.s32.totalorder %s153, %s155
      %p159 = scmp.eq.s32.totalorder %s35, 0
      %p160 = por %p158, %p159
      %p161 = scmp.ne.s32.totalorder %s153, %s155
      %p162 = scmp.eq.s32.totalorder %s40, 1
      %p163 = por %p161, %p162
      %p164 = scmp.ne.s32.totalorder %s155, %s156
      %p165 = scmp.eq.s32.totalorder %s40, 0
      %p166 = por %p164, %p165
      %p167 = scmp.ne.s32.totalorder %s155, %s156
      %p168 = scmp.eq.s32.totalorder %s41, 1
      %p169 = por %p167, %p168
      %p171 = scmp.ne.s32.totalorder %s156, %s170
      %p172 = scmp.eq.s32.totalorder %s41, 0
      %p173 = por %p171, %p172
      %s175 = sadd.s32 %s174, 1
      %p178 = scmp.eq.s32.totalorder %s35, 1
      %p179 = scmp.ne.s32.totalorder %s174, %s176
      %p180 = scmp.eq.s32.totalorder %s35, 0
      %p181 = por %p179, %p180
      %p182 = scmp.ne.s32.totalorder %s174, %s176
      %p183 = scmp.eq.s32.totalorder %s40, 1
      %p184 = por %p182, %p183
      %p185 = scmp.ne.s32.totalorder %s176, %s177
      %p186 = scmp.eq.s32.totalorder %s40, 0
      %p187 = por %p185, %p186
      %p188 = scmp.ne.s32.totalorder %s176, %s177
      %p189 = scmp.eq.s32.totalorder %s41, 1
      %p190 = por %p188, %p189
      %p192 = scmp.ne.s32.totalorder %s177, %s191
      %p193 = scmp.eq.s32.totalorder %s41, 0
      %p194 = por %p192, %p193
      %s196 = sadd.s32 %s195, 1
      %p199 = scmp.eq.s32.totalorder %s35, 1
      %p200 = scmp.ne.s32.totalorder %s195, %s197
      %p201 = scmp.eq.s32.totalorder %s35, 0
      %p202 = por %p200, %p201
      %p203 = scmp.ne.s32.totalorder %s195, %s197
      %p204 = scmp.eq.s32.totalorder %s40, 1
      %p205 = por %p203, %p204
      %p206 = scmp.ne.s32.totalorder %s197, %s198
      %p207 = scmp.eq.s32.totalorder %s40, 0
      %p208 = por %p206, %p207
      %p209 = scmp.ne.s32.totalorder %s197, %s198
      %p210 = scmp.eq.s32.totalorder %s41, 1
      %p211 = por %p209, %p210
      %p213 = scmp.ne.s32.totalorder %s198, %s212
      %p214 = scmp.eq.s32.totalorder %s41, 0
      %p215 = por %p213, %p214
      %s217 = sadd.s32 %s216, 1
      %p220 = scmp.eq.s32.totalorder %s35, 1
      %p221 = scmp.ne.s32.totalorder %s216, %s218
      %p222 = scmp.eq.s32.totalorder %s35, 0
      %p223 = por %p221, %p222
      %p224 = scmp.ne.s32.totalorder %s216, %s218
      %p225 = scmp.eq.s32.totalorder %s40, 1
      %p226 = por %p224, %p225
      %p227 = scmp.ne.s32.totalorder %s218, %s219
      %p228 = scmp.eq.s32.totalorder %s40, 0
      %p229 = por %p227, %p228
      %p230 = scmp.ne.s32.totalorder %s218, %s219
      %p231 = scmp.eq.s32.totalorder %s41, 1
      %p232 = por %p230, %p231
      %p234 = scmp.ne.s32.totalorder %s219, %s233
      %p235 = scmp.eq.s32.totalorder %s41, 0
      %p236 = por %p234, %p235
      %s238 = sadd.s32 %s237, 1
      %p241 = scmp.eq.s32.totalorder %s35, 1
      %p242 = scmp.ne.s32.totalorder %s237, %s239
      %p243 = scmp.eq.s32.totalorder %s35, 0
      %p244 = por %p242, %p243
      %p245 = scmp.ne.s32.totalorder %s237, %s239
      %p246 = scmp.eq.s32.totalorder %s40, 1
      %p247 = por %p245, %p246
      %p248 = scmp.ne.s32.totalorder %s239, %s240
      %p249 = scmp.eq.s32.totalorder %s40, 0
      %p250 = por %p248, %p249
      %p251 = scmp.ne.s32.totalorder %s239, %s240
      %p252 = scmp.eq.s32.totalorder %s41, 1
      %p253 = por %p251, %p252
      %p255 = scmp.ne.s32.totalorder %s240, %s254
      %p256 = scmp.eq.s32.totalorder %s41, 0
      %p257 = por %p255, %p256
      %s259 = sadd.s32 %s258, 1
      %p262 = scmp.eq.s32.totalorder %s35, 1
      %p263 = scmp.ne.s32.totalorder %s258, %s260
      %p264 = scmp.eq.s32.totalorder %s35, 0
      %p265 = por %p263, %p264
      %p266 = scmp.ne.s32.totalorder %s258, %s260
      %p267 = scmp.eq.s32.totalorder %s40, 1
      %p268 = por %p266, %p267
      %p269 = scmp.ne.s32.totalorder %s260, %s261
      %p270 = scmp.eq.s32.totalorder %s40, 0
      %p271 = por %p269, %p270
      %p272 = scmp.ne.s32.totalorder %s260, %s261
      %p273 = scmp.eq.s32.totalorder %s41, 1
      %p274 = por %p272, %p273
      %p276 = scmp.ne.s32.totalorder %s261, %s275
      %p277 = scmp.eq.s32.totalorder %s41, 0
      %p278 = por %p276, %p277
      %s280 = sadd.s32 %s279, 1
      %p283 = scmp.eq.s32.totalorder %s35, 1
      %p284 = scmp.ne.s32.totalorder %s279, %s281
      %p285 = scmp.eq.s32.totalorder %s35, 0
      %p286 = por %p284, %p285
      %p287 = scmp.ne.s32.totalorder %s279, %s281
      %p288 = scmp.eq.s32.totalorder %s40, 1
      %p289 = por %p287, %p288
      %p290 = scmp.ne.s32.totalorder %s281, %s282
      %p291 = scmp.eq.s32.totalorder %s40, 0
      %p292 = por %p290, %p291
      %p293 = scmp.ne.s32.totalorder %s281, %s282
      %p294 = scmp.eq.s32.totalorder %s41, 1
      %p295 = por %p293, %p294
      %p297 = scmp.ne.s32.totalorder %s282, %s296
      %p298 = scmp.eq.s32.totalorder %s41, 0
      %p299 = por %p297, %p298
      %s301 = sadd.s32 %s300, 1
      %p304 = scmp.eq.s32.totalorder %s35, 1
      %p305 = scmp.ne.s32.totalorder %s300, %s302
      %p306 = scmp.eq.s32.totalorder %s35, 0
      %p307 = por %p305, %p306
      %p308 = scmp.ne.s32.totalorder %s300, %s302
      %p309 = scmp.eq.s32.totalorder %s40, 1
      %p310 = por %p308, %p309
      %p311 = scmp.ne.s32.totalorder %s302, %s303
      %p312 = scmp.eq.s32.totalorder %s40, 0
      %p313 = por %p311, %p312
      %p314 = scmp.ne.s32.totalorder %s302, %s303
      %p315 = scmp.eq.s32.totalorder %s41, 1
      %p316 = por %p314, %p315
      %p318 = scmp.ne.s32.totalorder %s303, %s317
      %p319 = scmp.eq.s32.totalorder %s41, 0
      %p320 = por %p318, %p319
      %s322 = sadd.s32 %s321, 1
      %p325 = scmp.eq.s32.totalorder %s35, 1
      %p326 = scmp.ne.s32.totalorder %s321, %s323
      %p327 = scmp.eq.s32.totalorder %s35, 0
      %p328 = por %p326, %p327
      %p329 = scmp.ne.s32.totalorder %s321, %s323
      %p330 = scmp.eq.s32.totalorder %s40, 1
      %p331 = por %p329, %p330
      %p332 = scmp.ne.s32.totalorder %s323, %s324
      %p333 = scmp.eq.s32.totalorder %s40, 0
      %p334 = por %p332, %p333
      %p335 = scmp.ne.s32.totalorder %s323, %s324
      %p336 = scmp.eq.s32.totalorder %s41, 1
      %p337 = por %p335, %p336
      %p339 = scmp.ne.s32.totalorder %s324, %s338
      %p340 = scmp.eq.s32.totalorder %s41, 0
      %p341 = por %p339, %p340
      %s343 = sadd.s32 %s342, 1
      %p346 = scmp.eq.s32.totalorder %s35, 1
      %p347 = scmp.ne.s32.totalorder %s342, %s344
      %p348 = scmp.eq.s32.totalorder %s35, 0
      %p349 = por %p347, %p348
      %p350 = scmp.ne.s32.totalorder %s342, %s344
      %p351 = scmp.eq.s32.totalorder %s40, 1
      %p352 = por %p350, %p351
      %p353 = scmp.ne.s32.totalorder %s344, %s345
      %p354 = scmp.eq.s32.totalorder %s40, 0
      %p355 = por %p353, %p354
      %p356 = scmp.ne.s32.totalorder %s344, %s345
      %p357 = scmp.eq.s32.totalorder %s41, 1
      %p358 = por %p356, %p357
      %p360 = scmp.ne.s32.totalorder %s345, %s359
      %p361 = scmp.eq.s32.totalorder %s41, 0
      %p362 = por %p360, %p361
      %s364 = sadd.s32 %s363, 1
      %p367 = scmp.eq.s32.totalorder %s35, 1
      %p368 = scmp.ne.s32.totalorder %s363, %s365
      %p369 = scmp.eq.s32.totalorder %s35, 0
      %p370 = por %p368, %p369
      %p371 = scmp.ne.s32.totalorder %s363, %s365
      %p372 = scmp.eq.s32.totalorder %s40, 1
      %p373 = por %p371, %p372
      %p374 = scmp.ne.s32.totalorder %s365, %s366
      %p375 = scmp.eq.s32.totalorder %s40, 0
      %p376 = por %p374, %p375
      %p377 = scmp.ne.s32.totalorder %s365, %s366
      %p378 = scmp.eq.s32.totalorder %s41, 1
      %p379 = por %p377, %p378
      %p381 = scmp.ne.s32.totalorder %s366, %s380
      %p382 = scmp.eq.s32.totalorder %s41, 0
      %p383 = por %p381, %p382
      %s385 = sadd.s32 %s384, 1
      %p388 = scmp.eq.s32.totalorder %s35, 1
      %p389 = scmp.ne.s32.totalorder %s384, %s386
      %p390 = scmp.eq.s32.totalorder %s35, 0
      %p391 = por %p389, %p390
      %p392 = scmp.ne.s32.totalorder %s384, %s386
      %p393 = scmp.eq.s32.totalorder %s40, 1
      %p394 = por %p392, %p393
      %p395 = scmp.ne.s32.totalorder %s386, %s387
      %p396 = scmp.eq.s32.totalorder %s40, 0
      %p397 = por %p395, %p396
      %p398 = scmp.ne.s32.totalorder %s386, %s387
      %p399 = scmp.eq.s32.totalorder %s41, 1
      %p400 = por %p398, %p399
      %p402 = scmp.ne.s32.totalorder %s387, %s401
      %p403 = scmp.eq.s32.totalorder %s41, 0
      %p404 = por %p402, %p403
      %s406 = sadd.s32 %s405, 1
      %p409 = scmp.eq.s32.totalorder %s35, 1
      %p410 = scmp.ne.s32.totalorder %s405, %s407
      %p411 = scmp.eq.s32.totalorder %s35, 0
      %p412 = por %p410, %p411
      %p413 = scmp.ne.s32.totalorder %s405, %s407
      %p414 = scmp.eq.s32.totalorder %s40, 1
      %p415 = por %p413, %p414
      %p416 = scmp.ne.s32.totalorder %s407, %s408
      %p417 = scmp.eq.s32.totalorder %s40, 0
      %p418 = por %p416, %p417
      %p419 = scmp.ne.s32.totalorder %s407, %s408
      %p420 = scmp.eq.s32.totalorder %s41, 1
      %p421 = por %p419, %p420
      %p423 = scmp.ne.s32.totalorder %s408, %s422
      %p424 = scmp.eq.s32.totalorder %s41, 0
      %p425 = por %p423, %p424
      %s427 = sadd.s32 %s426, 1
      %p430 = scmp.eq.s32.totalorder %s35, 1
      %p431 = scmp.ne.s32.totalorder %s426, %s428
      %p432 = scmp.eq.s32.totalorder %s35, 0
      %p433 = por %p431, %p432
      %p434 = scmp.ne.s32.totalorder %s426, %s428
      %p435 = scmp.eq.s32.totalorder %s40, 1
      %p436 = por %p434, %p435
      %p437 = scmp.ne.s32.totalorder %s428, %s429
      %p438 = scmp.eq.s32.totalorder %s40, 0
      %p439 = por %p437, %p438
      %p440 = scmp.ne.s32.totalorder %s428, %s429
      %p441 = scmp.eq.s32.totalorder %s41, 1
      %p442 = por %p440, %p441
      %p444 = scmp.ne.s32.totalorder %s429, %s443
      %p445 = scmp.eq.s32.totalorder %s41, 0
      %p446 = por %p444, %p445
      %s448 = sadd.s32 %s447, 1
      %p451 = scmp.eq.s32.totalorder %s35, 1
      %p452 = scmp.ne.s32.totalorder %s447, %s449
      %p453 = scmp.eq.s32.totalorder %s35, 0
      %p454 = por %p452, %p453
      %p455 = scmp.ne.s32.totalorder %s447, %s449
      %p456 = scmp.eq.s32.totalorder %s40, 1
      %p457 = por %p455, %p456
      %p458 = scmp.ne.s32.totalorder %s449, %s450
      %p459 = scmp.eq.s32.totalorder %s40, 0
      %p460 = por %p458, %p459
      %p461 = scmp.ne.s32.totalorder %s449, %s450
      %p462 = scmp.eq.s32.totalorder %s41, 1
      %p463 = por %p461, %p462
      %p465 = scmp.ne.s32.totalorder %s450, %s464
      %p466 = scmp.eq.s32.totalorder %s41, 0
      %p467 = por %p465, %p466
      %s469 = sadd.s32 %s468, 1
      %p472 = scmp.eq.s32.totalorder %s35, 1
      %p473 = scmp.ne.s32.totalorder %s468, %s470
      %p474 = scmp.eq.s32.totalorder %s35, 0
      %p475 = por %p473, %p474
      %p476 = scmp.ne.s32.totalorder %s468, %s470
      %p477 = scmp.eq.s32.totalorder %s40, 1
      %p478 = por %p476, %p477
      %p479 = scmp.ne.s32.totalorder %s470, %s471
      %p480 = scmp.eq.s32.totalorder %s40, 0
      %p481 = por %p479, %p480
      %p482 = scmp.ne.s32.totalorder %s470, %s471
      %p483 = scmp.eq.s32.totalorder %s41, 1
      %p484 = por %p482, %p483
      %p486 = scmp.ne.s32.totalorder %s471, %s485
      %p487 = scmp.eq.s32.totalorder %s41, 0
      %p488 = por %p486, %p487
      %s489 = ssub.s32 %s35, %s42
      %p490 = scmp.eq.s32.totalorder %s489, 0
      %s492 = sadd.s32 %s491, 1
      %s493 = scalar_select %p490, %s491, %s492
      %p496 = pneg %p490
      %p497 = scmp.eq.s32.totalorder %s35, 1
      %p498 = por %p496, %p497
      %p499 = scmp.ne.s32.totalorder %s491, %s494
      %p500 = scmp.eq.s32.totalorder %s35, 0
      %p501 = por %p499, %p500
      %p502 = scmp.ne.s32.totalorder %s491, %s494
      %p503 = scmp.eq.s32.totalorder %s40, 1
      %p504 = por %p502, %p503
      %p505 = scmp.ne.s32.totalorder %s494, %s495
      %p506 = scmp.eq.s32.totalorder %s40, 0
      %p507 = por %p505, %p506
      %p508 = scmp.ne.s32.totalorder %s494, %s495
      %p509 = scmp.eq.s32.totalorder %s41, 1
      %p510 = por %p508, %p509
      %p512 = scmp.ne.s32.totalorder %s495, %s511
      %p513 = scmp.eq.s32.totalorder %s41, 0
      %p514 = por %p512, %p513
      %p515 = scmp.le.s32.totalorder 1, %s35
      %p516 = scmp.lt.s32.totalorder %s35, 3
      %p517 = pnand %p515, %p516
      %p518 = pneg %p517
      // Predicated region
      $region9: #{tpu_custom_call.1} parent=5 // pred_check
        _
      $region10: #{tpu_custom_call.1} parent=5 // pred_check_branch
        %520 = sbr.rel (%p517) target = $region12
      $region11: #{tpu_custom_call.1} parent=5 // pred_region
        %s521 = ssub.s32 %s35, 1
        // Predicated region
        $region13: #{tpu_custom_call.1} parent=11 // pred_check
          %p522 = pneg %p82
        $region14: #{tpu_custom_call.1} parent=11 // pred_check_branch
          %524 = sbr.rel (%p522) target = $region16
        $region15: #{tpu_custom_call.1} parent=11 // pred_region
          %s526 = ssub.s32 2048, 2048
          %527 = vsyncadd [#allocation4], %s526
          %s528 = sshll.u32 [#allocation3], 4
          %s529 = int_to_ptr.vmem [resolvable:$true] %s528
          %534 = dma.hbm_to_vmem [thread:$0]  %s1, 2048, %s529, [#allocation4], 64, 64, 4
        $region16: #{tpu_custom_call.1} parent=11 // pred_fallthru
          _
        // Predicated region
        $region17: #{tpu_custom_call.1} parent=11 // pred_check
          %p535 = pneg %p103
        $region18: #{tpu_custom_call.1} parent=11 // pred_check_branch
          %537 = sbr.rel (%p535) target = $region20
        $region19: #{tpu_custom_call.1} parent=11 // pred_region
          _
        $region20: #{tpu_custom_call.1} parent=11 // pred_fallthru
          _
        // Predicated region
        $region21: #{tpu_custom_call.1} parent=11 // pred_check
          %p538 = pneg %p124
        $region22: #{tpu_custom_call.1} parent=11 // pred_check_branch
          %540 = sbr.rel (%p538) target = $region24
        $region23: #{tpu_custom_call.1} parent=11 // pred_region
          %s542 = ssub.s32 4096, 4096
          %543 = vsyncadd [#allocation6], %s542
          %s544 = sshll.u32 [#allocation5], 4
          %s545 = int_to_ptr.vmem [resolvable:$true] %s544
          %550 = dma.hbm_to_vmem [thread:$0]  %s3, 4096, %s545, [#allocation6], 128, 128, 8
        $region24: #{tpu_custom_call.1} parent=11 // pred_fallthru
          _
        // Predicated region
        $region25: #{tpu_custom_call.1} parent=11 // pred_check
          %p551 = pneg %p145
        $region26: #{tpu_custom_call.1} parent=11 // pred_check_branch
          %553 = sbr.rel (%p551) target = $region28
        $region27: #{tpu_custom_call.1} parent=11 // pred_region
          %s555 = ssub.s32 32, 32
          %556 = vsyncadd [#allocation6], %s555
          %s558 = sshll.u32 [#allocation7], 4
          %s559 = int_to_ptr.vmem [resolvable:$true] %s558
          %561 = dma.hbm_to_vmem [thread:$0]  %s4, 32, %s559, [#allocation6]
        $region28: #{tpu_custom_call.1} parent=11 // pred_fallthru
          _
        // Predicated region
        $region29: #{tpu_custom_call.1} parent=11 // pred_check
          %p562 = pneg %p166
        $region30: #{tpu_custom_call.1} parent=11 // pred_check_branch
          %564 = sbr.rel (%p562) target = $region32
        $region31: #{tpu_custom_call.1} parent=11 // pred_region
          %s566 = ssub.s32 1024, 1024
          %567 = vsyncadd [#allocation9], %s566
          %s568 = sshll.u32 [#allocation8], 4
          %s569 = int_to_ptr.vmem [resolvable:$true] %s568
          %574 = dma.hbm_to_vmem [thread:$0]  %s5, 1024, %s569, [#allocation9], 64, 64, 4
        $region32: #{tpu_custom_call.1} parent=11 // pred_fallthru
          _
        // Predicated region
        $region33: #{tpu_custom_call.1} parent=11 // pred_check
          %p575 = pneg %p187
        $region34: #{tpu_custom_call.1} parent=11 // pred_check_branch
          %577 = sbr.rel (%p575) target = $region36
        $region35: #{tpu_custom_call.1} parent=11 // pred_region
          %s579 = ssub.s32 16, 16
          %580 = vsyncadd [#allocation9], %s579
          %s582 = sshll.u32 [#allocation10], 4
          %s583 = int_to_ptr.vmem [resolvable:$true] %s582
          %585 = dma.hbm_to_vmem [thread:$0]  %s6, 16, %s583, [#allocation9]
        $region36: #{tpu_custom_call.1} parent=11 // pred_fallthru
          _
        // Predicated region
        $region37: #{tpu_custom_call.1} parent=11 // pred_check
          %p586 = pneg %p208
        $region38: #{tpu_custom_call.1} parent=11 // pred_check_branch
          %588 = sbr.rel (%p586) target = $region40
        $region39: #{tpu_custom_call.1} parent=11 // pred_region
          %s590 = ssub.s32 2048, 2048
          %591 = vsyncadd [#allocation12], %s590
          %s592 = sshll.u32 [#allocation11], 4
          %s593 = int_to_ptr.vmem [resolvable:$true] %s592
          %598 = dma.hbm_to_vmem [thread:$0]  %s7, 2048, %s593, [#allocation12], 64, 64, 4
        $region40: #{tpu_custom_call.1} parent=11 // pred_fallthru
          _
        // Predicated region
        $region41: #{tpu_custom_call.1} parent=11 // pred_check
          %p599 = pneg %p229
        $region42: #{tpu_custom_call.1} parent=11 // pred_check_branch
          %601 = sbr.rel (%p599) target = $region44
        $region43: #{tpu_custom_call.1} parent=11 // pred_region
          %s603 = ssub.s32 16, 16
          %604 = vsyncadd [#allocation12], %s603
          %s606 = sshll.u32 [#allocation13], 4
          %s607 = int_to_ptr.vmem [resolvable:$true] %s606
          %609 = dma.hbm_to_vmem [thread:$0]  %s8, 16, %s607, [#allocation12]
        $region44: #{tpu_custom_call.1} parent=11 // pred_fallthru
          _
        // Predicated region
        $region45: #{tpu_custom_call.1} parent=11 // pred_check
          %p610 = pneg %p250
        $region46: #{tpu_custom_call.1} parent=11 // pred_check_branch
          %612 = sbr.rel (%p610) target = $region48
        $region47: #{tpu_custom_call.1} parent=11 // pred_region
          %s614 = ssub.s32 4096, 4096
          %615 = vsyncadd [#allocation15], %s614
          %s616 = sshll.u32 [#allocation14], 4
          %s617 = int_to_ptr.vmem [resolvable:$true] %s616
          %622 = dma.hbm_to_vmem [thread:$0]  %s9, 4096, %s617, [#allocation15], 128, 128, 8
        $region48: #{tpu_custom_call.1} parent=11 // pred_fallthru
          _
        // Predicated region
        $region49: #{tpu_custom_call.1} parent=11 // pred_check
          %p623 = pneg %p271
        $region50: #{tpu_custom_call.1} parent=11 // pred_check_branch
          %625 = sbr.rel (%p623) target = $region52
        $region51: #{tpu_custom_call.1} parent=11 // pred_region
          %s627 = ssub.s32 32, 32
          %628 = vsyncadd [#allocation15], %s627
          %s630 = sshll.u32 [#allocation16], 4
          %s631 = int_to_ptr.vmem [resolvable:$true] %s630
          %633 = dma.hbm_to_vmem [thread:$0]  %s10, 32, %s631, [#allocation15]
        $region52: #{tpu_custom_call.1} parent=11 // pred_fallthru
          _
        // Predicated region
        $region53: #{tpu_custom_call.1} parent=11 // pred_check
          %p634 = pneg %p292
        $region54: #{tpu_custom_call.1} parent=11 // pred_check_branch
          %636 = sbr.rel (%p634) target = $region56
        $region55: #{tpu_custom_call.1} parent=11 // pred_region
          %s638 = ssub.s32 1024, 1024
          %639 = vsyncadd [#allocation18], %s638
          %s640 = sshll.u32 [#allocation17], 4
          %s641 = int_to_ptr.vmem [resolvable:$true] %s640
          %646 = dma.hbm_to_vmem [thread:$0]  %s11, 1024, %s641, [#allocation18], 64, 64, 4
        $region56: #{tpu_custom_call.1} parent=11 // pred_fallthru
          _
        // Predicated region
        $region57: #{tpu_custom_call.1} parent=11 // pred_check
          %p647 = pneg %p313
        $region58: #{tpu_custom_call.1} parent=11 // pred_check_branch
          %649 = sbr.rel (%p647) target = $region60
        $region59: #{tpu_custom_call.1} parent=11 // pred_region
          %s651 = ssub.s32 16, 16
          %652 = vsyncadd [#allocation18], %s651
          %s654 = sshll.u32 [#allocation19], 4
          %s655 = int_to_ptr.vmem [resolvable:$true] %s654
          %657 = dma.hbm_to_vmem [thread:$0]  %s12, 16, %s655, [#allocation18]
        $region60: #{tpu_custom_call.1} parent=11 // pred_fallthru
          _
        // Predicated region
        $region61: #{tpu_custom_call.1} parent=11 // pred_check
          %p658 = pneg %p334
        $region62: #{tpu_custom_call.1} parent=11 // pred_check_branch
          %660 = sbr.rel (%p658) target = $region64
        $region63: #{tpu_custom_call.1} parent=11 // pred_region
          _
        $region64: #{tpu_custom_call.1} parent=11 // pred_fallthru
          _
        // Predicated region
        $region65: #{tpu_custom_call.1} parent=11 // pred_check
          %p661 = pneg %p355
        $region66: #{tpu_custom_call.1} parent=11 // pred_check_branch
          %663 = sbr.rel (%p661) target = $region68
        $region67: #{tpu_custom_call.1} parent=11 // pred_region
          %s665 = ssub.s32 16, 16
          %666 = vsyncadd [#allocation21], %s665
          %s668 = sshll.u32 [#allocation20], 4
          %s669 = int_to_ptr.vmem [resolvable:$true] %s668
          %671 = dma.hbm_to_vmem [thread:$0]  %s14, 16, %s669, [#allocation21]
        $region68: #{tpu_custom_call.1} parent=11 // pred_fallthru
          _
        // Predicated region
        $region69: #{tpu_custom_call.1} parent=11 // pred_check
          %p672 = pneg %p376
        $region70: #{tpu_custom_call.1} parent=11 // pred_check_branch
          %674 = sbr.rel (%p672) target = $region72
        $region71: #{tpu_custom_call.1} parent=11 // pred_region
          %s676 = ssub.s32 4096, 4096
          %677 = vsyncadd [#allocation21], %s676
          %s678 = sshll.u32 [#allocation22], 4
          %s679 = int_to_ptr.vmem [resolvable:$true] %s678
          %684 = dma.hbm_to_vmem [thread:$0]  %s15, 4096, %s679, [#allocation21], 128, 128, 8
        $region72: #{tpu_custom_call.1} parent=11 // pred_fallthru
          _
        // Predicated region
        $region73: #{tpu_custom_call.1} parent=11 // pred_check
          %p685 = pneg %p397
        $region74: #{tpu_custom_call.1} parent=11 // pred_check_branch
          %687 = sbr.rel (%p685) target = $region76
        $region75: #{tpu_custom_call.1} parent=11 // pred_region
          _
        $region76: #{tpu_custom_call.1} parent=11 // pred_fallthru
          _
        // Predicated region
        $region77: #{tpu_custom_call.1} parent=11 // pred_check
          %p688 = pneg %p418
        $region78: #{tpu_custom_call.1} parent=11 // pred_check_branch
          %690 = sbr.rel (%p688) target = $region80
        $region79: #{tpu_custom_call.1} parent=11 // pred_region
          %s692 = ssub.s32 1024, 1024
          %693 = vsyncadd [#allocation24], %s692
          %s694 = sshll.u32 [#allocation23], 4
          %s695 = int_to_ptr.vmem [resolvable:$true] %s694
          %700 = dma.hbm_to_vmem [thread:$0]  %s17, 1024, %s695, [#allocation24], 64, 64, 4
        $region80: #{tpu_custom_call.1} parent=11 // pred_fallthru
          _
        // Predicated region
        $region81: #{tpu_custom_call.1} parent=11 // pred_check
          %p701 = pneg %p439
        $region82: #{tpu_custom_call.1} parent=11 // pred_check_branch
          %703 = sbr.rel (%p701) target = $region84
        $region83: #{tpu_custom_call.1} parent=11 // pred_region
          _
        $region84: #{tpu_custom_call.1} parent=11 // pred_fallthru
          _
        // Predicated region
        $region85: #{tpu_custom_call.1} parent=11 // pred_check
          %p704 = pneg %p460
        $region86: #{tpu_custom_call.1} parent=11 // pred_check_branch
          %706 = sbr.rel (%p704) target = $region88
        $region87: #{tpu_custom_call.1} parent=11 // pred_region
          _
        $region88: #{tpu_custom_call.1} parent=11 // pred_fallthru
          _
        // Predicated region
        $region89: #{tpu_custom_call.1} parent=11 // pred_check
          %p707 = pneg %p481
        $region90: #{tpu_custom_call.1} parent=11 // pred_check_branch
          %709 = sbr.rel (%p707) target = $region92
        $region91: #{tpu_custom_call.1} parent=11 // pred_region
          _
        $region92: #{tpu_custom_call.1} parent=11 // pred_fallthru
          _
      $region12: #{tpu_custom_call.1} parent=5 // pred_fallthru
        _
      %p710 = scmp.lt.s32.totalorder %s35, 2
      // Predicated region
      $region93: #{tpu_custom_call.1} parent=5 // pred_check
        %p711 = pneg %p710
      $region94: #{tpu_custom_call.1} parent=5 // pred_check_branch
        %713 = sbr.rel (%p711) target = $region96
      $region95: #{tpu_custom_call.1} parent=5 // pred_region
        // Predicated region
        $region97: #{tpu_custom_call.1} parent=95 // pred_check
          %p714 = pneg %p55
        $region98: #{tpu_custom_call.1} parent=95 // pred_check_branch
          %716 = sbr.rel (%p714) target = $region100
        $region99: #{tpu_custom_call.1} parent=95 // pred_region
          %p717 = scmp.lt.s32.totalorder %s35, 1
          %s718 = scalar_select %p717, %s35, 1
          %s719 = smul.addr %s718, 2
          %s720 = smul.addr %s719, 8
          %s721 = scalar_lea.vmem %s0, %s720
        $region100: #{tpu_custom_call.1} parent=95 // pred_fallthru
          _
      $region96: #{tpu_custom_call.1} parent=5 // pred_fallthru
        _
      %p722 = scmp.le.s32.totalorder 1, %s35
      %p723 = scmp.lt.s32.totalorder %s35, 3
      %p724 = pnand %p722, %p723
      %p725 = pneg %p724
      // Predicated region
      $region101: #{tpu_custom_call.1} parent=5 // pred_check
        _
      $region102: #{tpu_custom_call.1} parent=5 // pred_check_branch
        %727 = sbr.rel (%p724) target = $region104
      $region103: #{tpu_custom_call.1} parent=5 // pred_region
        %s728 = ssub.s32 %s35, 1
        // Predicated region
        $region105: #{tpu_custom_call.1} parent=103 // pred_check
          %p729 = pneg %p82
        $region106: #{tpu_custom_call.1} parent=103 // pred_check_branch
          %731 = sbr.rel (%p729) target = $region108
        $region107: #{tpu_custom_call.1} parent=103 // pred_region
          %732 = dma.done [#allocation4], 2048
        $region108: #{tpu_custom_call.1} parent=103 // pred_fallthru
          _
        // Predicated region
        $region109: #{tpu_custom_call.1} parent=103 // pred_check
          %p733 = pneg %p124
        $region110: #{tpu_custom_call.1} parent=103 // pred_check_branch
          %735 = sbr.rel (%p733) target = $region112
        $region111: #{tpu_custom_call.1} parent=103 // pred_region
          %736 = dma.done [#allocation6], 4096
        $region112: #{tpu_custom_call.1} parent=103 // pred_fallthru
          _
        // Predicated region
        $region113: #{tpu_custom_call.1} parent=103 // pred_check
          %p737 = pneg %p145
        $region114: #{tpu_custom_call.1} parent=103 // pred_check_branch
          %739 = sbr.rel (%p737) target = $region116
        $region115: #{tpu_custom_call.1} parent=103 // pred_region
          %740 = dma.done [#allocation6], 32
        $region116: #{tpu_custom_call.1} parent=103 // pred_fallthru
          _
        // Predicated region
        $region117: #{tpu_custom_call.1} parent=103 // pred_check
          %p741 = pneg %p166
        $region118: #{tpu_custom_call.1} parent=103 // pred_check_branch
          %743 = sbr.rel (%p741) target = $region120
        $region119: #{tpu_custom_call.1} parent=103 // pred_region
          %744 = dma.done [#allocation9], 1024
        $region120: #{tpu_custom_call.1} parent=103 // pred_fallthru
          _
        // Predicated region
        $region121: #{tpu_custom_call.1} parent=103 // pred_check
          %p745 = pneg %p187
        $region122: #{tpu_custom_call.1} parent=103 // pred_check_branch
          %747 = sbr.rel (%p745) target = $region124
        $region123: #{tpu_custom_call.1} parent=103 // pred_region
          %748 = dma.done [#allocation9], 16
        $region124: #{tpu_custom_call.1} parent=103 // pred_fallthru
          _
        // Predicated region
        $region125: #{tpu_custom_call.1} parent=103 // pred_check
          %p749 = pneg %p208
        $region126: #{tpu_custom_call.1} parent=103 // pred_check_branch
          %751 = sbr.rel (%p749) target = $region128
        $region127: #{tpu_custom_call.1} parent=103 // pred_region
          %752 = dma.done [#allocation12], 2048
        $region128: #{tpu_custom_call.1} parent=103 // pred_fallthru
          _
        // Predicated region
        $region129: #{tpu_custom_call.1} parent=103 // pred_check
          %p753 = pneg %p229
        $region130: #{tpu_custom_call.1} parent=103 // pred_check_branch
          %755 = sbr.rel (%p753) target = $region132
        $region131: #{tpu_custom_call.1} parent=103 // pred_region
          %756 = dma.done [#allocation12], 16
        $region132: #{tpu_custom_call.1} parent=103 // pred_fallthru
          _
        // Predicated region
        $region133: #{tpu_custom_call.1} parent=103 // pred_check
          %p757 = pneg %p250
        $region134: #{tpu_custom_call.1} parent=103 // pred_check_branch
          %759 = sbr.rel (%p757) target = $region136
        $region135: #{tpu_custom_call.1} parent=103 // pred_region
          %760 = dma.done [#allocation15], 4096
        $region136: #{tpu_custom_call.1} parent=103 // pred_fallthru
          _
        // Predicated region
        $region137: #{tpu_custom_call.1} parent=103 // pred_check
          %p761 = pneg %p271
        $region138: #{tpu_custom_call.1} parent=103 // pred_check_branch
          %763 = sbr.rel (%p761) target = $region140
        $region139: #{tpu_custom_call.1} parent=103 // pred_region
          %764 = dma.done [#allocation15], 32
        $region140: #{tpu_custom_call.1} parent=103 // pred_fallthru
          _
        // Predicated region
        $region141: #{tpu_custom_call.1} parent=103 // pred_check
          %p765 = pneg %p292
        $region142: #{tpu_custom_call.1} parent=103 // pred_check_branch
          %767 = sbr.rel (%p765) target = $region144
        $region143: #{tpu_custom_call.1} parent=103 // pred_region
          %768 = dma.done [#allocation18], 1024
        $region144: #{tpu_custom_call.1} parent=103 // pred_fallthru
          _
        // Predicated region
        $region145: #{tpu_custom_call.1} parent=103 // pred_check
          %p769 = pneg %p313
        $region146: #{tpu_custom_call.1} parent=103 // pred_check_branch
          %771 = sbr.rel (%p769) target = $region148
        $region147: #{tpu_custom_call.1} parent=103 // pred_region
          %772 = dma.done [#allocation18], 16
        $region148: #{tpu_custom_call.1} parent=103 // pred_fallthru
          _
        // Predicated region
        $region149: #{tpu_custom_call.1} parent=103 // pred_check
          %p773 = pneg %p355
        $region150: #{tpu_custom_call.1} parent=103 // pred_check_branch
          %775 = sbr.rel (%p773) target = $region152
        $region151: #{tpu_custom_call.1} parent=103 // pred_region
          %776 = dma.done [#allocation21], 16
        $region152: #{tpu_custom_call.1} parent=103 // pred_fallthru
          _
        // Predicated region
        $region153: #{tpu_custom_call.1} parent=103 // pred_check
          %p777 = pneg %p376
        $region154: #{tpu_custom_call.1} parent=103 // pred_check_branch
          %779 = sbr.rel (%p777) target = $region156
        $region155: #{tpu_custom_call.1} parent=103 // pred_region
          %780 = dma.done [#allocation21], 4096
        $region156: #{tpu_custom_call.1} parent=103 // pred_fallthru
          _
        // Predicated region
        $region157: #{tpu_custom_call.1} parent=103 // pred_check
          %p781 = pneg %p418
        $region158: #{tpu_custom_call.1} parent=103 // pred_check_branch
          %783 = sbr.rel (%p781) target = $region160
        $region159: #{tpu_custom_call.1} parent=103 // pred_region
          %784 = dma.done [#allocation24], 1024
        $region160: #{tpu_custom_call.1} parent=103 // pred_fallthru
          _
        %p785 = scmp.lt.s32.totalorder %s40, 1
        %s786 = scalar_select %p785, %s40, 1
        %s787 = smul.addr %s786, 2
        %s788 = smul.addr %s787, 8
        %s789 = scalar_lea.vmem %s0, %s788
        %p790 = pneg %p61
        %p791 = pneg %p58
        %p792 = pneg %p82
        %p793 = pneg %p79
        %p794 = pneg %p103
        %p795 = pneg %p100
        %p796 = pneg %p124
        %p797 = pneg %p121
        %p798 = pneg %p145
        %p799 = pneg %p142
        %p800 = pneg %p166
        %p801 = pneg %p163
        %p802 = pneg %p187
        %p803 = pneg %p184
        %p804 = pneg %p208
        %p805 = pneg %p205
        %p806 = pneg %p229
        %p807 = pneg %p226
        %p808 = pneg %p250
        %p809 = pneg %p247
        %p810 = pneg %p271
        %p811 = pneg %p268
        %p812 = pneg %p292
        %p813 = pneg %p289
        %p814 = pneg %p313
        %p815 = pneg %p310
        %p816 = pneg %p334
        %p817 = pneg %p331
        %p818 = pneg %p355
        %p819 = pneg %p352
        %p820 = pneg %p376
        %p821 = pneg %p373
        %p822 = pneg %p397
        %p823 = pneg %p394
        %p824 = pneg %p418
        %p825 = pneg %p415
        %p826 = pneg %p439
        %p827 = pneg %p436
        %p828 = pneg %p460
        %p829 = pneg %p457
        %p830 = pneg %p481
        %p831 = pneg %p478
        %p832 = pneg %p507
        %p833 = pneg %p504
        %p834 = scmp.lt.s32.totalorder %s40, 1
        %s835 = scalar_select %p834, %s40, 1
        %s836 = smul.addr %s835, 2
        %s837 = smul.addr %s836, 8
        %s838 = scalar_lea.vmem %s21, %s837
        %p839 = scmp.lt.s32.totalorder %s40, 1
        %s840 = scalar_select %p839, %s40, 1
        %s841 = smul.addr %s840, 2
        %s842 = smul.addr %s841, 8
        %s843 = scalar_lea.vmem %s0, %s842
        %p844 = scmp.lt.s32.totalorder %s40, 1
        %s845 = scalar_select %p844, %s40, 1
        %s846 = smul.addr %s845, 2
        %s847 = smul.addr %s846, 8
        %s848 = scalar_lea.vmem %s21, %s847
        %850 = vst [vmem:[#allocation2] sm:$0xff] 0.0
        %851 = vst [vmem:[#allocation2 + $0x8] sm:$0xff] 0.0
        %852 = vst [vmem:[#allocation2 + $0x10] sm:$0xff] 0.0
        %v853 = vld [vmem:[%s843] sm:$0xff]
        %v854 = vld [vmem:[%s843 + $0x8] sm:$0xff]
        %vm855 = vcmask 31744
        %856 = vst.msk [vmem:[#allocation2 + $0x8] sm:$0xff] %vm855, %v853
        %857 = vst.msk [vmem:[#allocation2 + $0x10] sm:$0xff] %vm855, %v854
        %v858 = vld [vmem:[#allocation2 + $0x7] sm:$0xff]
        %v859 = vld [vmem:[#allocation2 + $0xf] sm:$0xff]
        %v860 = vld [vmem:[#allocation2 + $0x8] sm:$0xff]
        %v861 = vld [vmem:[#allocation2 + $0x10] sm:$0xff]
        %v862 = vpack.c.bf16 %v859, %v858
        %v863 = vpack.c.bf16 %v861, %v860
        %v864 = vld [vmem:[#allocation3] sm:$0xf]
        %v865 = vld [vmem:[#allocation3 + $0x4] sm:$0xf]
        %v866 = vld [vmem:[#allocation3 + $0x8] sm:$0xf]
        %v867 = vld [vmem:[#allocation3 + $0xc] sm:$0xf]
        %v868 = vld [vmem:[#allocation3 + $0x10] sm:$0xf]
        %v869 = vld [vmem:[#allocation3 + $0x14] sm:$0xf]
        %v870 = vld [vmem:[#allocation3 + $0x18] sm:$0xf]
        %v871 = vld [vmem:[#allocation3 + $0x1c] sm:$0xf]
        %v872 = vld [vmem:[#allocation3 + $0x20] sm:$0xf]
        %v873 = vld [vmem:[#allocation3 + $0x24] sm:$0xf]
        %v874 = vld [vmem:[#allocation3 + $0x28] sm:$0xf]
        %v875 = vld [vmem:[#allocation3 + $0x2c] sm:$0xf]
        %v876 = vld [vmem:[#allocation3 + $0x30] sm:$0xf]
        %v877 = vld [vmem:[#allocation3 + $0x34] sm:$0xf]
        %v878 = vld [vmem:[#allocation3 + $0x38] sm:$0xf]
        %v879 = vld [vmem:[#allocation3 + $0x3c] sm:$0xf]
        %v880 = vld [vmem:[#allocation3 + $0x40] sm:$0xf]
        %v881 = vld [vmem:[#allocation3 + $0x44] sm:$0xf]
        %v882 = vld [vmem:[#allocation3 + $0x48] sm:$0xf]
        %v883 = vld [vmem:[#allocation3 + $0x4c] sm:$0xf]
        %v884 = vld [vmem:[#allocation3 + $0x50] sm:$0xf]
        %v885 = vld [vmem:[#allocation3 + $0x54] sm:$0xf]
        %v886 = vld [vmem:[#allocation3 + $0x58] sm:$0xf]
        %v887 = vld [vmem:[#allocation3 + $0x5c] sm:$0xf]
        %v888 = vld [vmem:[#allocation3 + $0x60] sm:$0xf]
        %v889 = vld [vmem:[#allocation3 + $0x64] sm:$0xf]
        %v890 = vld [vmem:[#allocation3 + $0x68] sm:$0xf]
        %v891 = vld [vmem:[#allocation3 + $0x6c] sm:$0xf]
        %v892 = vld [vmem:[#allocation3 + $0x70] sm:$0xf]
        %v893 = vld [vmem:[#allocation3 + $0x74] sm:$0xf]
        %v894 = vld [vmem:[#allocation3 + $0x78] sm:$0xf]
        %v895 = vld [vmem:[#allocation3 + $0x7c] sm:$0xf]
        %v896 = vld [vmem:[%s2] sm:$0x1]
        %v898 = vlaneseq
        %v899 = vshrl.u32 %v898, 7
        %v900 = vsub.s32 0, %v899
        %v901 = vrot.slane %v896, %v900
        %v935 = vunpack.c.l.b16 %v864
        %v936 = vunpack.c.l.b16 %v865
        %v937 = vunpack.c.l.b16 %v866
        %v938 = vunpack.c.l.b16 %v867
        %v939 = vunpack.c.l.b16 %v868
        %v940 = vunpack.c.l.b16 %v869
        %v941 = vunpack.c.l.b16 %v870
        %v942 = vunpack.c.l.b16 %v871
        %v943 = vunpack.c.l.b16 %v872
        %v944 = vunpack.c.l.b16 %v873
        %v945 = vunpack.c.l.b16 %v874
        %v946 = vunpack.c.l.b16 %v875
        %v947 = vunpack.c.l.b16 %v876
        %v948 = vunpack.c.l.b16 %v877
        %v949 = vunpack.c.l.b16 %v878
        %v950 = vunpack.c.l.b16 %v879
        %v951 = vunpack.c.l.b16 %v880
        %v952 = vunpack.c.l.b16 %v881
        %v953 = vunpack.c.l.b16 %v882
        %v954 = vunpack.c.l.b16 %v883
        %v955 = vunpack.c.l.b16 %v884
        %v956 = vunpack.c.l.b16 %v885
        %v957 = vunpack.c.l.b16 %v886
        %v958 = vunpack.c.l.b16 %v887
        %v959 = vunpack.c.l.b16 %v888
        %v960 = vunpack.c.l.b16 %v889
        %v961 = vunpack.c.l.b16 %v890
        %v962 = vunpack.c.l.b16 %v891
        %v963 = vunpack.c.l.b16 %v892
        %v964 = vunpack.c.l.b16 %v893
        %v965 = vunpack.c.l.b16 %v894
        %v966 = vunpack.c.l.b16 %v895
        %v967 = vpack.c.b16 %v936, %v935
        %v968 = vpack.c.b16 %v938, %v937
        %v969 = vpack.c.b16 %v940, %v939
        %v970 = vpack.c.b16 %v942, %v941
        %v971 = vpack.c.b16 %v944, %v943
        %v972 = vpack.c.b16 %v946, %v945
        %v973 = vpack.c.b16 %v948, %v947
        %v974 = vpack.c.b16 %v950, %v949
        %v975 = vpack.c.b16 %v952, %v951
        %v976 = vpack.c.b16 %v954, %v953
        %v977 = vpack.c.b16 %v956, %v955
        %v978 = vpack.c.b16 %v958, %v957
        %v979 = vpack.c.b16 %v960, %v959
        %v980 = vpack.c.b16 %v962, %v961
        %v981 = vpack.c.b16 %v964, %v963
        %v982 = vpack.c.b16 %v966, %v965
        %999 = vmatprep.subr.bf16.mxu0 0
        %1000 = vmatpush1.bf16.msra.mxu0 %v974
        %1001 = vmatprep.subr.bf16.mxu0 0
        %1002 = vmatpush1.bf16.msra.mxu0 %v973
        %1003 = vmatprep.subr.bf16.mxu0 0
        %1004 = vmatpush1.bf16.msra.mxu0 %v972
        %1005 = vmatprep.subr.bf16.mxu0 0
        %1006 = vmatpush1.bf16.msra.mxu0 %v971
        %1007 = vmatprep.subr.bf16.mxu0 0
        %1008 = vmatpush1.bf16.msra.mxu0 %v970
        %1009 = vmatprep.subr.bf16.mxu0 0
        %1010 = vmatpush1.bf16.msra.mxu0 %v969
        %1011 = vmatprep.subr.bf16.mxu0 0
        %1012 = vmatpush1.bf16.msra.mxu0 %v968
        %1013 = vmatprep.subr.bf16.mxu0 0
        %1014 = vmatpush1.bf16.msra.mxu0 %v967
        %1015 = vmatprep.subr.bf16.mxu0 0
        %1016 = vmatpush2.bf16.msra.mxu0 %v982
        %1017 = vmatprep.subr.bf16.mxu0 0
        %1018 = vmatpush2.bf16.msra.mxu0 %v981
        %1019 = vmatprep.subr.bf16.mxu0 0
        %1020 = vmatpush2.bf16.msra.mxu0 %v980
        %1021 = vmatprep.subr.bf16.mxu0 0
        %1022 = vmatpush2.bf16.msra.mxu0 %v979
        %1023 = vmatprep.subr.bf16.mxu0 0
        %1024 = vmatpush2.bf16.msra.mxu0 %v978
        %1025 = vmatprep.subr.bf16.mxu0 0
        %1026 = vmatpush2.bf16.msra.mxu0 %v977
        %1027 = vmatprep.subr.bf16.mxu0 0
        %1028 = vmatpush2.bf16.msra.mxu0 %v976
        %1029 = vmatprep.subr.bf16.mxu0 0
        %1030 = vmatpush2.bf16.msra.mxu0 %v975
        %1031 = vmatprep.mubr.bf16.mxu0 %v863
        %1032 = vmatmul.mubr.bf16.gmra.mxu0 %v862
        %v1033 = vpop.f32.mrf.mxu0
        %v1034 = vadd.f32 %v901, %v1033
        %v1035 = vpop.f32.mrf.mxu0
        %v1036 = vpop.f32.mrf.mxu0
        %v1037 = vadd.f32 %v901, %v1036
        %v1038 = vpop.f32.mrf.mxu0
        %1039 = vdwg.mxu0
        %v1040 = vmax.f32 %v1034, 0.0
        %v1041 = vmax.f32 %v1037, 0.0
        %v1042 = vld [vmem:[#allocation8] sm:$0xf]
        %v1043 = vld [vmem:[#allocation8 + $0x4] sm:$0xf]
        %v1044 = vld [vmem:[#allocation8 + $0x8] sm:$0xf]
        %v1045 = vld [vmem:[#allocation8 + $0xc] sm:$0xf]
        %v1046 = vld [vmem:[#allocation8 + $0x10] sm:$0xf]
        %v1047 = vld [vmem:[#allocation8 + $0x14] sm:$0xf]
        %v1048 = vld [vmem:[#allocation8 + $0x18] sm:$0xf]
        %v1049 = vld [vmem:[#allocation8 + $0x1c] sm:$0xf]
        %v1050 = vld [vmem:[#allocation8 + $0x20] sm:$0xf]
        %v1051 = vld [vmem:[#allocation8 + $0x24] sm:$0xf]
        %v1052 = vld [vmem:[#allocation8 + $0x28] sm:$0xf]
        %v1053 = vld [vmem:[#allocation8 + $0x2c] sm:$0xf]
        %v1054 = vld [vmem:[#allocation8 + $0x30] sm:$0xf]
        %v1055 = vld [vmem:[#allocation8 + $0x34] sm:$0xf]
        %v1056 = vld [vmem:[#allocation8 + $0x38] sm:$0xf]
        %v1057 = vld [vmem:[#allocation8 + $0x3c] sm:$0xf]
        %v1058 = vld [vmem:[#allocation10] sm:$0x1]
        %v1060 = vlaneseq
        %v1061 = vshrl.u32 %v1060, 7
        %v1062 = vsub.s32 0, %v1061
        %v1063 = vrot.slane %v1058, %v1062
        %v1081 = vunpack.c.l.b16 %v1042
        %v1082 = vunpack.c.l.b16 %v1043
        %v1083 = vunpack.c.l.b16 %v1044
        %v1084 = vunpack.c.l.b16 %v1045
        %v1085 = vunpack.c.l.b16 %v1046
        %v1086 = vunpack.c.l.b16 %v1047
        %v1087 = vunpack.c.l.b16 %v1048
        %v1088 = vunpack.c.l.b16 %v1049
        %v1089 = vunpack.c.l.b16 %v1050
        %v1090 = vunpack.c.l.b16 %v1051
        %v1091 = vunpack.c.l.b16 %v1052
        %v1092 = vunpack.c.l.b16 %v1053
        %v1093 = vunpack.c.l.b16 %v1054
        %v1094 = vunpack.c.l.b16 %v1055
        %v1095 = vunpack.c.l.b16 %v1056
        %v1096 = vunpack.c.l.b16 %v1057
        %v1097 = vpack.c.b16 %v1082, %v1081
        %v1098 = vpack.c.b16 %v1084, %v1083
        %v1099 = vpack.c.b16 %v1086, %v1085
        %v1100 = vpack.c.b16 %v1088, %v1087
        %v1101 = vpack.c.b16 %v1090, %v1089
        %v1102 = vpack.c.b16 %v1092, %v1091
        %v1103 = vpack.c.b16 %v1094, %v1093
        %v1104 = vpack.c.b16 %v1096, %v1095
        %1113 = vmatprep.subr.bf16.mxu0 0
        %1114 = vmatpush1.bf16.msra.mxu0 %v1104
        %1115 = vmatprep.subr.bf16.mxu0 0
        %1116 = vmatpush1.bf16.msra.mxu0 %v1103
        %1117 = vmatprep.subr.bf16.mxu0 0
        %1118 = vmatpush1.bf16.msra.mxu0 %v1102
        %1119 = vmatprep.subr.bf16.mxu0 0
        %1120 = vmatpush1.bf16.msra.mxu0 %v1101
        %1121 = vmatprep.subr.bf16.mxu0 0
        %1122 = vmatpush1.bf16.msra.mxu0 %v1100
        %1123 = vmatprep.subr.bf16.mxu0 0
        %1124 = vmatpush1.bf16.msra.mxu0 %v1099
        %1125 = vmatprep.subr.bf16.mxu0 0
        %1126 = vmatpush1.bf16.msra.mxu0 %v1098
        %1127 = vmatprep.subr.bf16.mxu0 0
        %1128 = vmatpush1.bf16.msra.mxu0 %v1097
        %1129 = vmatprep.subr.bf16.mxu0 0
        %1130 = vmatpush2.bf16.msra.mxu0 0
        %1131 = vmatprep.subr.bf16.mxu0 0
        %1132 = vmatpush2.bf16.msra.mxu0 0
        %1133 = vmatprep.subr.bf16.mxu0 0
        %1134 = vmatpush2.bf16.msra.mxu0 0
        %1135 = vmatprep.subr.bf16.mxu0 0
        %1136 = vmatpush2.bf16.msra.mxu0 0
        %1137 = vmatprep.subr.bf16.mxu0 0
        %1138 = vmatpush2.bf16.msra.mxu0 0
        %1139 = vmatprep.subr.bf16.mxu0 0
        %1140 = vmatpush2.bf16.msra.mxu0 0
        %1141 = vmatprep.subr.bf16.mxu0 0
        %1142 = vmatpush2.bf16.msra.mxu0 0
        %1143 = vmatprep.subr.bf16.mxu0 0
        %1144 = vmatpush2.bf16.msra.mxu0 0
        %1145 = vmatprep.mubr.bf16.mxu0 0
        %1146 = vmatmul.mubr.bf16.gmra.mxu0 %v863
        %v1147 = vpop.f32.mrf.mxu0
        %v1148 = vadd.f32 %v1063, %v1147
        %v1149 = vpop.f32.mrf.mxu0
        %v1150 = vpop.f32.mrf.mxu0
        %v1151 = vadd.f32 %v1063, %v1150
        %v1152 = vpop.f32.mrf.mxu0
        %1153 = vdwg.mxu0
        %1154 = vst [vmem:[#allocation2 + $0x8] sm:$0xff] %v1040
        %1155 = vst [vmem:[#allocation2 + $0x10] sm:$0xff] %v1041
        %v1156 = vld [vmem:[#allocation2 + $0x7] sm:$0xff]
        %v1157 = vld [vmem:[#allocation2 + $0xf] sm:$0xff]
        %v1158 = vld [vmem:[#allocation2 + $0x8] sm:$0xff]
        %v1159 = vld [vmem:[#allocation2 + $0x10] sm:$0xff]
        %v1160 = vpack.c.bf16 %v1157, %v1156
        %v1161 = vpack.c.bf16 %v1159, %v1158
        %v1162 = vld [vmem:[#allocation5] sm:$0xff]
        %v1163 = vld [vmem:[#allocation5 + $0x8] sm:$0xff]
        %v1164 = vld [vmem:[#allocation5 + $0x10] sm:$0xff]
        %v1165 = vld [vmem:[#allocation5 + $0x18] sm:$0xff]
        %v1166 = vld [vmem:[#allocation5 + $0x20] sm:$0xff]
        %v1167 = vld [vmem:[#allocation5 + $0x28] sm:$0xff]
        %v1168 = vld [vmem:[#allocation5 + $0x30] sm:$0xff]
        %v1169 = vld [vmem:[#allocation5 + $0x38] sm:$0xff]
        %v1170 = vld [vmem:[#allocation5 + $0x40] sm:$0xff]
        %v1171 = vld [vmem:[#allocation5 + $0x48] sm:$0xff]
        %v1172 = vld [vmem:[#allocation5 + $0x50] sm:$0xff]
        %v1173 = vld [vmem:[#allocation5 + $0x58] sm:$0xff]
        %v1174 = vld [vmem:[#allocation5 + $0x60] sm:$0xff]
        %v1175 = vld [vmem:[#allocation5 + $0x68] sm:$0xff]
        %v1176 = vld [vmem:[#allocation5 + $0x70] sm:$0xff]
        %v1177 = vld [vmem:[#allocation5 + $0x78] sm:$0xff]
        %v1178 = vld [vmem:[#allocation5 + $0x80] sm:$0xff]
        %v1179 = vld [vmem:[#allocation5 + $0x88] sm:$0xff]
        %v1180 = vld [vmem:[#allocation5 + $0x90] sm:$0xff]
        %v1181 = vld [vmem:[#allocation5 + $0x98] sm:$0xff]
        %v1182 = vld [vmem:[#allocation5 + $0xa0] sm:$0xff]
        %v1183 = vld [vmem:[#allocation5 + $0xa8] sm:$0xff]
        %v1184 = vld [vmem:[#allocation5 + $0xb0] sm:$0xff]
        %v1185 = vld [vmem:[#allocation5 + $0xb8] sm:$0xff]
        %v1186 = vld [vmem:[#allocation5 + $0xc0] sm:$0xff]
        %v1187 = vld [vmem:[#allocation5 + $0xc8] sm:$0xff]
        %v1188 = vld [vmem:[#allocation5 + $0xd0] sm:$0xff]
        %v1189 = vld [vmem:[#allocation5 + $0xd8] sm:$0xff]
        %v1190 = vld [vmem:[#allocation5 + $0xe0] sm:$0xff]
        %v1191 = vld [vmem:[#allocation5 + $0xe8] sm:$0xff]
        %v1192 = vld [vmem:[#allocation5 + $0xf0] sm:$0xff]
        %v1193 = vld [vmem:[#allocation5 + $0xf8] sm:$0xff]
        %v1194 = vld [vmem:[#allocation7] sm:$0x3]
        %v1196 = vlaneseq
        %v1197 = vshrl.u32 %v1196, 7
        %v1198 = vsub.s32 0, %v1197
        %v1199 = vrot.slane %v1194, %v1198
        %v1200 = vlaneseq
        %v1201 = vshrl.u32 %v1200, 7
        %v1202 = vsub.s32 1, %v1201
        %v1203 = vrot.slane %v1194, %v1202
        %v1238 = vunpack.c.l.b16 %v1162
        %v1239 = vunpack.c.h.b16 %v1162
        %v1240 = vunpack.c.l.b16 %v1163
        %v1241 = vunpack.c.h.b16 %v1163
        %v1242 = vunpack.c.l.b16 %v1164
        %v1243 = vunpack.c.h.b16 %v1164
        %v1244 = vunpack.c.l.b16 %v1165
        %v1245 = vunpack.c.h.b16 %v1165
        %v1246 = vunpack.c.l.b16 %v1166
        %v1247 = vunpack.c.h.b16 %v1166
        %v1248 = vunpack.c.l.b16 %v1167
        %v1249 = vunpack.c.h.b16 %v1167
        %v1250 = vunpack.c.l.b16 %v1168
        %v1251 = vunpack.c.h.b16 %v1168
        %v1252 = vunpack.c.l.b16 %v1169
        %v1253 = vunpack.c.h.b16 %v1169
        %v1254 = vunpack.c.l.b16 %v1170
        %v1255 = vunpack.c.h.b16 %v1170
        %v1256 = vunpack.c.l.b16 %v1171
        %v1257 = vunpack.c.h.b16 %v1171
        %v1258 = vunpack.c.l.b16 %v1172
        %v1259 = vunpack.c.h.b16 %v1172
        %v1260 = vunpack.c.l.b16 %v1173
        %v1261 = vunpack.c.h.b16 %v1173
        %v1262 = vunpack.c.l.b16 %v1174
        %v1263 = vunpack.c.h.b16 %v1174
        %v1264 = vunpack.c.l.b16 %v1175
        %v1265 = vunpack.c.h.b16 %v1175
        %v1266 = vunpack.c.l.b16 %v1176
        %v1267 = vunpack.c.h.b16 %v1176
        %v1268 = vunpack.c.l.b16 %v1177
        %v1269 = vunpack.c.h.b16 %v1177
        %v1270 = vunpack.c.l.b16 %v1178
        %v1271 = vunpack.c.h.b16 %v1178
        %v1272 = vunpack.c.l.b16 %v1179
        %v1273 = vunpack.c.h.b16 %v1179
        %v1274 = vunpack.c.l.b16 %v1180
        %v1275 = vunpack.c.h.b16 %v1180
        %v1276 = vunpack.c.l.b16 %v1181
        %v1277 = vunpack.c.h.b16 %v1181
        %v1278 = vunpack.c.l.b16 %v1182
        %v1279 = vunpack.c.h.b16 %v1182
        %v1280 = vunpack.c.l.b16 %v1183
        %v1281 = vunpack.c.h.b16 %v1183
        %v1282 = vunpack.c.l.b16 %v1184
        %v1283 = vunpack.c.h.b16 %v1184
        %v1284 = vunpack.c.l.b16 %v1185
        %v1285 = vunpack.c.h.b16 %v1185
        %v1286 = vunpack.c.l.b16 %v1186
        %v1287 = vunpack.c.h.b16 %v1186
        %v1288 = vunpack.c.l.b16 %v1187
        %v1289 = vunpack.c.h.b16 %v1187
        %v1290 = vunpack.c.l.b16 %v1188
        %v1291 = vunpack.c.h.b16 %v1188
        %v1292 = vunpack.c.l.b16 %v1189
        %v1293 = vunpack.c.h.b16 %v1189
        %v1294 = vunpack.c.l.b16 %v1190
        %v1295 = vunpack.c.h.b16 %v1190
        %v1296 = vunpack.c.l.b16 %v1191
        %v1297 = vunpack.c.h.b16 %v1191
        %v1298 = vunpack.c.l.b16 %v1192
        %v1299 = vunpack.c.h.b16 %v1192
        %v1300 = vunpack.c.l.b16 %v1193
        %v1301 = vunpack.c.h.b16 %v1193
        %v1302 = vpack.c.b16 %v1240, %v1238
        %v1303 = vpack.c.b16 %v1241, %v1239
        %v1304 = vpack.c.b16 %v1244, %v1242
        %v1305 = vpack.c.b16 %v1245, %v1243
        %v1306 = vpack.c.b16 %v1248, %v1246
        %v1307 = vpack.c.b16 %v1249, %v1247
        %v1308 = vpack.c.b16 %v1252, %v1250
        %v1309 = vpack.c.b16 %v1253, %v1251
        %v1310 = vpack.c.b16 %v1256, %v1254
        %v1311 = vpack.c.b16 %v1257, %v1255
        %v1312 = vpack.c.b16 %v1260, %v1258
        %v1313 = vpack.c.b16 %v1261, %v1259
        %v1314 = vpack.c.b16 %v1264, %v1262
        %v1315 = vpack.c.b16 %v1265, %v1263
        %v1316 = vpack.c.b16 %v1268, %v1266
        %v1317 = vpack.c.b16 %v1269, %v1267
        %v1318 = vpack.c.b16 %v1272, %v1270
        %v1319 = vpack.c.b16 %v1273, %v1271
        %v1320 = vpack.c.b16 %v1276, %v1274
        %v1321 = vpack.c.b16 %v1277, %v1275
        %v1322 = vpack.c.b16 %v1280, %v1278
        %v1323 = vpack.c.b16 %v1281, %v1279
        %v1324 = vpack.c.b16 %v1284, %v1282
        %v1325 = vpack.c.b16 %v1285, %v1283
        %v1326 = vpack.c.b16 %v1288, %v1286
        %v1327 = vpack.c.b16 %v1289, %v1287
        %v1328 = vpack.c.b16 %v1292, %v1290
        %v1329 = vpack.c.b16 %v1293, %v1291
        %v1330 = vpack.c.b16 %v1296, %v1294
        %v1331 = vpack.c.b16 %v1297, %v1295
        %v1332 = vpack.c.b16 %v1300, %v1298
        %v1333 = vpack.c.b16 %v1301, %v1299
        %1366 = vmatprep.subr.bf16.mxu0 %v1317
        %1367 = vmatpush1.bf16.msra.mxu0 %v1316
        %1368 = vmatprep.subr.bf16.mxu0 %v1315
        %1369 = vmatpush1.bf16.msra.mxu0 %v1314
        %1370 = vmatprep.subr.bf16.mxu0 %v1313
        %1371 = vmatpush1.bf16.msra.mxu0 %v1312
        %1372 = vmatprep.subr.bf16.mxu0 %v1311
        %1373 = vmatpush1.bf16.msra.mxu0 %v1310
        %1374 = vmatprep.subr.bf16.mxu0 %v1309
        %1375 = vmatpush1.bf16.msra.mxu0 %v1308
        %1376 = vmatprep.subr.bf16.mxu0 %v1307
        %1377 = vmatpush1.bf16.msra.mxu0 %v1306
        %1378 = vmatprep.subr.bf16.mxu0 %v1305
        %1379 = vmatpush1.bf16.msra.mxu0 %v1304
        %1380 = vmatprep.subr.bf16.mxu0 %v1303
        %1381 = vmatpush1.bf16.msra.mxu0 %v1302
        %1382 = vmatprep.subr.bf16.mxu0 %v1333
        %1383 = vmatpush2.bf16.msra.mxu0 %v1332
        %1384 = vmatprep.subr.bf16.mxu0 %v1331
        %1385 = vmatpush2.bf16.msra.mxu0 %v1330
        %1386 = vmatprep.subr.bf16.mxu0 %v1329
        %1387 = vmatpush2.bf16.msra.mxu0 %v1328
        %1388 = vmatprep.subr.bf16.mxu0 %v1327
        %1389 = vmatpush2.bf16.msra.mxu0 %v1326
        %1390 = vmatprep.subr.bf16.mxu0 %v1325
        %1391 = vmatpush2.bf16.msra.mxu0 %v1324
        %1392 = vmatprep.subr.bf16.mxu0 %v1323
        %1393 = vmatpush2.bf16.msra.mxu0 %v1322
        %1394 = vmatprep.subr.bf16.mxu0 %v1321
        %1395 = vmatpush2.bf16.msra.mxu0 %v1320
        %1396 = vmatprep.subr.bf16.mxu0 %v1319
        %1397 = vmatpush2.bf16.msra.mxu0 %v1318
        %1398 = vmatprep.mubr.bf16.mxu0 %v1161
        %1399 = vmatmul.mubr.bf16.gmra.mxu0 %v1160
        %v1400 = vpop.f32.mrf.mxu0
        %v1401 = vadd.f32 %v1199, %v1400
        %v1402 = vpop.f32.mrf.mxu0
        %v1403 = vadd.f32 %v1203, %v1402
        %v1404 = vpop.f32.mrf.mxu0
        %v1405 = vadd.f32 %v1199, %v1404
        %v1406 = vpop.f32.mrf.mxu0
        %v1407 = vadd.f32 %v1203, %v1406
        %1408 = vdwg.mxu0
        %v1409 = vtanh.pop %v1401
        %v1410 = vtanh.pop %v1405
        %v1411 = vxor.u32 %v1403, 2147483648
        %v1412 = vxor.u32 %v1407, 2147483648
        %v1413 = vmul.f32 %v1411, 1.442695
        %v1414 = vpow.pop %v1413
        %v1415 = vmul.f32 %v1412, 1.442695
        %v1416 = vpow.pop %v1415
        %v1417 = vadd.f32 %v1414, 1.0
        %v1418 = vadd.f32 %v1416, 1.0
        %v1419 = vrcp.pop %v1417
        %v1420 = vmul.f32 1.0, %v1419
        %v1421 = vrcp.pop %v1418
        %v1422 = vmul.f32 1.0, %v1421
        %v1423 = vmul.f32 %v1409, %v1420
        %v1424 = vmul.f32 %v1410, %v1422
        %v1425 = vadd.f32 %v1423, %v1148
        %v1426 = vadd.f32 %v1424, %v1151
        %v1427 = vmax.f32 %v1425, 0.0
        %v1428 = vmax.f32 %v1426, 0.0
        %1429 = vst [vmem:[#allocation2 + $0x8] sm:$0xff] %v1427
        %1430 = vst [vmem:[#allocation2 + $0x10] sm:$0xff] %v1428
        %v1431 = vld [vmem:[#allocation2 + $0x6] sm:$0xff]
        %v1432 = vld [vmem:[#allocation2 + $0xe] sm:$0xff]
        %v1433 = vld [vmem:[#allocation2 + $0x8] sm:$0xff]
        %v1434 = vld [vmem:[#allocation2 + $0x10] sm:$0xff]
        %v1435 = vpack.c.bf16 %v1432, %v1431
        %v1436 = vpack.c.bf16 %v1434, %v1433
        %v1437 = vld [vmem:[#allocation11] sm:$0xf]
        %v1438 = vld [vmem:[#allocation11 + $0x4] sm:$0xf]
        %v1439 = vld [vmem:[#allocation11 + $0x8] sm:$0xf]
        %v1440 = vld [vmem:[#allocation11 + $0xc] sm:$0xf]
        %v1441 = vld [vmem:[#allocation11 + $0x10] sm:$0xf]
        %v1442 = vld [vmem:[#allocation11 + $0x14] sm:$0xf]
        %v1443 = vld [vmem:[#allocation11 + $0x18] sm:$0xf]
        %v1444 = vld [vmem:[#allocation11 + $0x1c] sm:$0xf]
        %v1445 = vld [vmem:[#allocation11 + $0x20] sm:$0xf]
        %v1446 = vld [vmem:[#allocation11 + $0x24] sm:$0xf]
        %v1447 = vld [vmem:[#allocation11 + $0x28] sm:$0xf]
        %v1448 = vld [vmem:[#allocation11 + $0x2c] sm:$0xf]
        %v1449 = vld [vmem:[#allocation11 + $0x30] sm:$0xf]
        %v1450 = vld [vmem:[#allocation11 + $0x34] sm:$0xf]
        %v1451 = vld [vmem:[#allocation11 + $0x38] sm:$0xf]
        %v1452 = vld [vmem:[#allocation11 + $0x3c] sm:$0xf]
        %v1453 = vld [vmem:[#allocation11 + $0x40] sm:$0xf]
        %v1454 = vld [vmem:[#allocation11 + $0x44] sm:$0xf]
        %v1455 = vld [vmem:[#allocation11 + $0x48] sm:$0xf]
        %v1456 = vld [vmem:[#allocation11 + $0x4c] sm:$0xf]
        %v1457 = vld [vmem:[#allocation11 + $0x50] sm:$0xf]
        %v1458 = vld [vmem:[#allocation11 + $0x54] sm:$0xf]
        %v1459 = vld [vmem:[#allocation11 + $0x58] sm:$0xf]
        %v1460 = vld [vmem:[#allocation11 + $0x5c] sm:$0xf]
        %v1461 = vld [vmem:[#allocation11 + $0x60] sm:$0xf]
        %v1462 = vld [vmem:[#allocation11 + $0x64] sm:$0xf]
        %v1463 = vld [vmem:[#allocation11 + $0x68] sm:$0xf]
        %v1464 = vld [vmem:[#allocation11 + $0x6c] sm:$0xf]
        %v1465 = vld [vmem:[#allocation11 + $0x70] sm:$0xf]
        %v1466 = vld [vmem:[#allocation11 + $0x74] sm:$0xf]
        %v1467 = vld [vmem:[#allocation11 + $0x78] sm:$0xf]
        %v1468 = vld [vmem:[#allocation11 + $0x7c] sm:$0xf]
        %v1469 = vld [vmem:[#allocation13] sm:$0x1]
        %v1471 = vlaneseq
        %v1472 = vshrl.u32 %v1471, 7
        %v1473 = vsub.s32 0, %v1472
        %v1474 = vrot.slane %v1469, %v1473
        %v1508 = vunpack.c.l.b16 %v1437
        %v1509 = vunpack.c.l.b16 %v1438
        %v1510 = vunpack.c.l.b16 %v1439
        %v1511 = vunpack.c.l.b16 %v1440
        %v1512 = vunpack.c.l.b16 %v1441
        %v1513 = vunpack.c.l.b16 %v1442
        %v1514 = vunpack.c.l.b16 %v1443
        %v1515 = vunpack.c.l.b16 %v1444
        %v1516 = vunpack.c.l.b16 %v1445
        %v1517 = vunpack.c.l.b16 %v1446
        %v1518 = vunpack.c.l.b16 %v1447
        %v1519 = vunpack.c.l.b16 %v1448
        %v1520 = vunpack.c.l.b16 %v1449
        %v1521 = vunpack.c.l.b16 %v1450
        %v1522 = vunpack.c.l.b16 %v1451
        %v1523 = vunpack.c.l.b16 %v1452
        %v1524 = vunpack.c.l.b16 %v1453
        %v1525 = vunpack.c.l.b16 %v1454
        %v1526 = vunpack.c.l.b16 %v1455
        %v1527 = vunpack.c.l.b16 %v1456
        %v1528 = vunpack.c.l.b16 %v1457
        %v1529 = vunpack.c.l.b16 %v1458
        %v1530 = vunpack.c.l.b16 %v1459
        %v1531 = vunpack.c.l.b16 %v1460
        %v1532 = vunpack.c.l.b16 %v1461
        %v1533 = vunpack.c.l.b16 %v1462
        %v1534 = vunpack.c.l.b16 %v1463
        %v1535 = vunpack.c.l.b16 %v1464
        %v1536 = vunpack.c.l.b16 %v1465
        %v1537 = vunpack.c.l.b16 %v1466
        %v1538 = vunpack.c.l.b16 %v1467
        %v1539 = vunpack.c.l.b16 %v1468
        %v1540 = vpack.c.b16 %v1509, %v1508
        %v1541 = vpack.c.b16 %v1511, %v1510
        %v1542 = vpack.c.b16 %v1513, %v1512
        %v1543 = vpack.c.b16 %v1515, %v1514
        %v1544 = vpack.c.b16 %v1517, %v1516
        %v1545 = vpack.c.b16 %v1519, %v1518
        %v1546 = vpack.c.b16 %v1521, %v1520
        %v1547 = vpack.c.b16 %v1523, %v1522
        %v1548 = vpack.c.b16 %v1525, %v1524
        %v1549 = vpack.c.b16 %v1527, %v1526
        %v1550 = vpack.c.b16 %v1529, %v1528
        %v1551 = vpack.c.b16 %v1531, %v1530
        %v1552 = vpack.c.b16 %v1533, %v1532
        %v1553 = vpack.c.b16 %v1535, %v1534
        %v1554 = vpack.c.b16 %v1537, %v1536
        %v1555 = vpack.c.b16 %v1539, %v1538
        %1572 = vmatprep.subr.bf16.mxu0 0
        %1573 = vmatpush1.bf16.msra.mxu0 %v1547
        %1574 = vmatprep.subr.bf16.mxu0 0
        %1575 = vmatpush1.bf16.msra.mxu0 %v1546
        %1576 = vmatprep.subr.bf16.mxu0 0
        %1577 = vmatpush1.bf16.msra.mxu0 %v1545
        %1578 = vmatprep.subr.bf16.mxu0 0
        %1579 = vmatpush1.bf16.msra.mxu0 %v1544
        %1580 = vmatprep.subr.bf16.mxu0 0
        %1581 = vmatpush1.bf16.msra.mxu0 %v1543
        %1582 = vmatprep.subr.bf16.mxu0 0
        %1583 = vmatpush1.bf16.msra.mxu0 %v1542
        %1584 = vmatprep.subr.bf16.mxu0 0
        %1585 = vmatpush1.bf16.msra.mxu0 %v1541
        %1586 = vmatprep.subr.bf16.mxu0 0
        %1587 = vmatpush1.bf16.msra.mxu0 %v1540
        %1588 = vmatprep.subr.bf16.mxu0 0
        %1589 = vmatpush2.bf16.msra.mxu0 %v1555
        %1590 = vmatprep.subr.bf16.mxu0 0
        %1591 = vmatpush2.bf16.msra.mxu0 %v1554
        %1592 = vmatprep.subr.bf16.mxu0 0
        %1593 = vmatpush2.bf16.msra.mxu0 %v1553
        %1594 = vmatprep.subr.bf16.mxu0 0
        %1595 = vmatpush2.bf16.msra.mxu0 %v1552
        %1596 = vmatprep.subr.bf16.mxu0 0
        %1597 = vmatpush2.bf16.msra.mxu0 %v1551
        %1598 = vmatprep.subr.bf16.mxu0 0
        %1599 = vmatpush2.bf16.msra.mxu0 %v1550
        %1600 = vmatprep.subr.bf16.mxu0 0
        %1601 = vmatpush2.bf16.msra.mxu0 %v1549
        %1602 = vmatprep.subr.bf16.mxu0 0
        %1603 = vmatpush2.bf16.msra.mxu0 %v1548
        %1604 = vmatprep.mubr.bf16.mxu0 %v1436
        %1605 = vmatmul.mubr.bf16.gmra.mxu0 %v1435
        %v1606 = vpop.f32.mrf.mxu0
        %v1607 = vadd.f32 %v1474, %v1606
        %v1608 = vpop.f32.mrf.mxu0
        %v1609 = vpop.f32.mrf.mxu0
        %v1610 = vadd.f32 %v1474, %v1609
        %v1611 = vpop.f32.mrf.mxu0
        %1612 = vdwg.mxu0
        %v1613 = vmax.f32 %v1607, 0.0
        %v1614 = vmax.f32 %v1610, 0.0
        %v1615 = vld [vmem:[#allocation17] sm:$0xf]
        %v1616 = vld [vmem:[#allocation17 + $0x4] sm:$0xf]
        %v1617 = vld [vmem:[#allocation17 + $0x8] sm:$0xf]
        %v1618 = vld [vmem:[#allocation17 + $0xc] sm:$0xf]
        %v1619 = vld [vmem:[#allocation17 + $0x10] sm:$0xf]
        %v1620 = vld [vmem:[#allocation17 + $0x14] sm:$0xf]
        %v1621 = vld [vmem:[#allocation17 + $0x18] sm:$0xf]
        %v1622 = vld [vmem:[#allocation17 + $0x1c] sm:$0xf]
        %v1623 = vld [vmem:[#allocation17 + $0x20] sm:$0xf]
        %v1624 = vld [vmem:[#allocation17 + $0x24] sm:$0xf]
        %v1625 = vld [vmem:[#allocation17 + $0x28] sm:$0xf]
        %v1626 = vld [vmem:[#allocation17 + $0x2c] sm:$0xf]
        %v1627 = vld [vmem:[#allocation17 + $0x30] sm:$0xf]
        %v1628 = vld [vmem:[#allocation17 + $0x34] sm:$0xf]
        %v1629 = vld [vmem:[#allocation17 + $0x38] sm:$0xf]
        %v1630 = vld [vmem:[#allocation17 + $0x3c] sm:$0xf]
        %v1631 = vld [vmem:[#allocation19] sm:$0x1]
        %v1633 = vlaneseq
        %v1634 = vshrl.u32 %v1633, 7
        %v1635 = vsub.s32 0, %v1634
        %v1636 = vrot.slane %v1631, %v1635
        %v1654 = vunpack.c.l.b16 %v1615
        %v1655 = vunpack.c.l.b16 %v1616
        %v1656 = vunpack.c.l.b16 %v1617
        %v1657 = vunpack.c.l.b16 %v1618
        %v1658 = vunpack.c.l.b16 %v1619
        %v1659 = vunpack.c.l.b16 %v1620
        %v1660 = vunpack.c.l.b16 %v1621
        %v1661 = vunpack.c.l.b16 %v1622
        %v1662 = vunpack.c.l.b16 %v1623
        %v1663 = vunpack.c.l.b16 %v1624
        %v1664 = vunpack.c.l.b16 %v1625
        %v1665 = vunpack.c.l.b16 %v1626
        %v1666 = vunpack.c.l.b16 %v1627
        %v1667 = vunpack.c.l.b16 %v1628
        %v1668 = vunpack.c.l.b16 %v1629
        %v1669 = vunpack.c.l.b16 %v1630
        %v1670 = vpack.c.b16 %v1655, %v1654
        %v1671 = vpack.c.b16 %v1657, %v1656
        %v1672 = vpack.c.b16 %v1659, %v1658
        %v1673 = vpack.c.b16 %v1661, %v1660
        %v1674 = vpack.c.b16 %v1663, %v1662
        %v1675 = vpack.c.b16 %v1665, %v1664
        %v1676 = vpack.c.b16 %v1667, %v1666
        %v1677 = vpack.c.b16 %v1669, %v1668
        %1686 = vmatprep.subr.bf16.mxu0 0
        %1687 = vmatpush1.bf16.msra.mxu0 %v1677
        %1688 = vmatprep.subr.bf16.mxu0 0
        %1689 = vmatpush1.bf16.msra.mxu0 %v1676
        %1690 = vmatprep.subr.bf16.mxu0 0
        %1691 = vmatpush1.bf16.msra.mxu0 %v1675
        %1692 = vmatprep.subr.bf16.mxu0 0
        %1693 = vmatpush1.bf16.msra.mxu0 %v1674
        %1694 = vmatprep.subr.bf16.mxu0 0
        %1695 = vmatpush1.bf16.msra.mxu0 %v1673
        %1696 = vmatprep.subr.bf16.mxu0 0
        %1697 = vmatpush1.bf16.msra.mxu0 %v1672
        %1698 = vmatprep.subr.bf16.mxu0 0
        %1699 = vmatpush1.bf16.msra.mxu0 %v1671
        %1700 = vmatprep.subr.bf16.mxu0 0
        %1701 = vmatpush1.bf16.msra.mxu0 %v1670
        %1702 = vmatprep.subr.bf16.mxu0 0
        %1703 = vmatpush2.bf16.msra.mxu0 0
        %1704 = vmatprep.subr.bf16.mxu0 0
        %1705 = vmatpush2.bf16.msra.mxu0 0
        %1706 = vmatprep.subr.bf16.mxu0 0
        %1707 = vmatpush2.bf16.msra.mxu0 0
        %1708 = vmatprep.subr.bf16.mxu0 0
        %1709 = vmatpush2.bf16.msra.mxu0 0
        %1710 = vmatprep.subr.bf16.mxu0 0
        %1711 = vmatpush2.bf16.msra.mxu0 0
        %1712 = vmatprep.subr.bf16.mxu0 0
        %1713 = vmatpush2.bf16.msra.mxu0 0
        %1714 = vmatprep.subr.bf16.mxu0 0
        %1715 = vmatpush2.bf16.msra.mxu0 0
        %1716 = vmatprep.subr.bf16.mxu0 0
        %1717 = vmatpush2.bf16.msra.mxu0 0
        %1718 = vmatprep.mubr.bf16.mxu0 0
        %1719 = vmatmul.mubr.bf16.gmra.mxu0 %v1436
        %v1720 = vpop.f32.mrf.mxu0
        %v1721 = vadd.f32 %v1636, %v1720
        %v1722 = vpop.f32.mrf.mxu0
        %v1723 = vpop.f32.mrf.mxu0
        %v1724 = vadd.f32 %v1636, %v1723
        %v1725 = vpop.f32.mrf.mxu0
        %1726 = vdwg.mxu0
        %1727 = vst [vmem:[#allocation2 + $0x8] sm:$0xff] %v1613
        %1728 = vst [vmem:[#allocation2 + $0x10] sm:$0xff] %v1614
        %v1729 = vld [vmem:[#allocation2 + $0x6] sm:$0xff]
        %v1730 = vld [vmem:[#allocation2 + $0xe] sm:$0xff]
        %v1731 = vld [vmem:[#allocation2 + $0x8] sm:$0xff]
        %v1732 = vld [vmem:[#allocation2 + $0x10] sm:$0xff]
        %v1733 = vpack.c.bf16 %v1730, %v1729
        %v1734 = vpack.c.bf16 %v1732, %v1731
        %v1735 = vld [vmem:[#allocation14] sm:$0xff]
        %v1736 = vld [vmem:[#allocation14 + $0x8] sm:$0xff]
        %v1737 = vld [vmem:[#allocation14 + $0x10] sm:$0xff]
        %v1738 = vld [vmem:[#allocation14 + $0x18] sm:$0xff]
        %v1739 = vld [vmem:[#allocation14 + $0x20] sm:$0xff]
        %v1740 = vld [vmem:[#allocation14 + $0x28] sm:$0xff]
        %v1741 = vld [vmem:[#allocation14 + $0x30] sm:$0xff]
        %v1742 = vld [vmem:[#allocation14 + $0x38] sm:$0xff]
        %v1743 = vld [vmem:[#allocation14 + $0x40] sm:$0xff]
        %v1744 = vld [vmem:[#allocation14 + $0x48] sm:$0xff]
        %v1745 = vld [vmem:[#allocation14 + $0x50] sm:$0xff]
        %v1746 = vld [vmem:[#allocation14 + $0x58] sm:$0xff]
        %v1747 = vld [vmem:[#allocation14 + $0x60] sm:$0xff]
        %v1748 = vld [vmem:[#allocation14 + $0x68] sm:$0xff]
        %v1749 = vld [vmem:[#allocation14 + $0x70] sm:$0xff]
        %v1750 = vld [vmem:[#allocation14 + $0x78] sm:$0xff]
        %v1751 = vld [vmem:[#allocation14 + $0x80] sm:$0xff]
        %v1752 = vld [vmem:[#allocation14 + $0x88] sm:$0xff]
        %v1753 = vld [vmem:[#allocation14 + $0x90] sm:$0xff]
        %v1754 = vld [vmem:[#allocation14 + $0x98] sm:$0xff]
        %v1755 = vld [vmem:[#allocation14 + $0xa0] sm:$0xff]
        %v1756 = vld [vmem:[#allocation14 + $0xa8] sm:$0xff]
        %v1757 = vld [vmem:[#allocation14 + $0xb0] sm:$0xff]
        %v1758 = vld [vmem:[#allocation14 + $0xb8] sm:$0xff]
        %v1759 = vld [vmem:[#allocation14 + $0xc0] sm:$0xff]
        %v1760 = vld [vmem:[#allocation14 + $0xc8] sm:$0xff]
        %v1761 = vld [vmem:[#allocation14 + $0xd0] sm:$0xff]
        %v1762 = vld [vmem:[#allocation14 + $0xd8] sm:$0xff]
        %v1763 = vld [vmem:[#allocation14 + $0xe0] sm:$0xff]
        %v1764 = vld [vmem:[#allocation14 + $0xe8] sm:$0xff]
        %v1765 = vld [vmem:[#allocation14 + $0xf0] sm:$0xff]
        %v1766 = vld [vmem:[#allocation14 + $0xf8] sm:$0xff]
        %v1767 = vld [vmem:[#allocation16] sm:$0x3]
        %v1769 = vlaneseq
        %v1770 = vshrl.u32 %v1769, 7
        %v1771 = vsub.s32 0, %v1770
        %v1772 = vrot.slane %v1767, %v1771
        %v1773 = vlaneseq
        %v1774 = vshrl.u32 %v1773, 7
        %v1775 = vsub.s32 1, %v1774
        %v1776 = vrot.slane %v1767, %v1775
        %v1811 = vunpack.c.l.b16 %v1735
        %v1812 = vunpack.c.h.b16 %v1735
        %v1813 = vunpack.c.l.b16 %v1736
        %v1814 = vunpack.c.h.b16 %v1736
        %v1815 = vunpack.c.l.b16 %v1737
        %v1816 = vunpack.c.h.b16 %v1737
        %v1817 = vunpack.c.l.b16 %v1738
        %v1818 = vunpack.c.h.b16 %v1738
        %v1819 = vunpack.c.l.b16 %v1739
        %v1820 = vunpack.c.h.b16 %v1739
        %v1821 = vunpack.c.l.b16 %v1740
        %v1822 = vunpack.c.h.b16 %v1740
        %v1823 = vunpack.c.l.b16 %v1741
        %v1824 = vunpack.c.h.b16 %v1741
        %v1825 = vunpack.c.l.b16 %v1742
        %v1826 = vunpack.c.h.b16 %v1742
        %v1827 = vunpack.c.l.b16 %v1743
        %v1828 = vunpack.c.h.b16 %v1743
        %v1829 = vunpack.c.l.b16 %v1744
        %v1830 = vunpack.c.h.b16 %v1744
        %v1831 = vunpack.c.l.b16 %v1745
        %v1832 = vunpack.c.h.b16 %v1745
        %v1833 = vunpack.c.l.b16 %v1746
        %v1834 = vunpack.c.h.b16 %v1746
        %v1835 = vunpack.c.l.b16 %v1747
        %v1836 = vunpack.c.h.b16 %v1747
        %v1837 = vunpack.c.l.b16 %v1748
        %v1838 = vunpack.c.h.b16 %v1748
        %v1839 = vunpack.c.l.b16 %v1749
        %v1840 = vunpack.c.h.b16 %v1749
        %v1841 = vunpack.c.l.b16 %v1750
        %v1842 = vunpack.c.h.b16 %v1750
        %v1843 = vunpack.c.l.b16 %v1751
        %v1844 = vunpack.c.h.b16 %v1751
        %v1845 = vunpack.c.l.b16 %v1752
        %v1846 = vunpack.c.h.b16 %v1752
        %v1847 = vunpack.c.l.b16 %v1753
        %v1848 = vunpack.c.h.b16 %v1753
        %v1849 = vunpack.c.l.b16 %v1754
        %v1850 = vunpack.c.h.b16 %v1754
        %v1851 = vunpack.c.l.b16 %v1755
        %v1852 = vunpack.c.h.b16 %v1755
        %v1853 = vunpack.c.l.b16 %v1756
        %v1854 = vunpack.c.h.b16 %v1756
        %v1855 = vunpack.c.l.b16 %v1757
        %v1856 = vunpack.c.h.b16 %v1757
        %v1857 = vunpack.c.l.b16 %v1758
        %v1858 = vunpack.c.h.b16 %v1758
        %v1859 = vunpack.c.l.b16 %v1759
        %v1860 = vunpack.c.h.b16 %v1759
        %v1861 = vunpack.c.l.b16 %v1760
        %v1862 = vunpack.c.h.b16 %v1760
        %v1863 = vunpack.c.l.b16 %v1761
        %v1864 = vunpack.c.h.b16 %v1761
        %v1865 = vunpack.c.l.b16 %v1762
        %v1866 = vunpack.c.h.b16 %v1762
        %v1867 = vunpack.c.l.b16 %v1763
        %v1868 = vunpack.c.h.b16 %v1763
        %v1869 = vunpack.c.l.b16 %v1764
        %v1870 = vunpack.c.h.b16 %v1764
        %v1871 = vunpack.c.l.b16 %v1765
        %v1872 = vunpack.c.h.b16 %v1765
        %v1873 = vunpack.c.l.b16 %v1766
        %v1874 = vunpack.c.h.b16 %v1766
        %v1875 = vpack.c.b16 %v1813, %v1811
        %v1876 = vpack.c.b16 %v1814, %v1812
        %v1877 = vpack.c.b16 %v1817, %v1815
        %v1878 = vpack.c.b16 %v1818, %v1816
        %v1879 = vpack.c.b16 %v1821, %v1819
        %v1880 = vpack.c.b16 %v1822, %v1820
        %v1881 = vpack.c.b16 %v1825, %v1823
        %v1882 = vpack.c.b16 %v1826, %v1824
        %v1883 = vpack.c.b16 %v1829, %v1827
        %v1884 = vpack.c.b16 %v1830, %v1828
        %v1885 = vpack.c.b16 %v1833, %v1831
        %v1886 = vpack.c.b16 %v1834, %v1832
        %v1887 = vpack.c.b16 %v1837, %v1835
        %v1888 = vpack.c.b16 %v1838, %v1836
        %v1889 = vpack.c.b16 %v1841, %v1839
        %v1890 = vpack.c.b16 %v1842, %v1840
        %v1891 = vpack.c.b16 %v1845, %v1843
        %v1892 = vpack.c.b16 %v1846, %v1844
        %v1893 = vpack.c.b16 %v1849, %v1847
        %v1894 = vpack.c.b16 %v1850, %v1848
        %v1895 = vpack.c.b16 %v1853, %v1851
        %v1896 = vpack.c.b16 %v1854, %v1852
        %v1897 = vpack.c.b16 %v1857, %v1855
        %v1898 = vpack.c.b16 %v1858, %v1856
        %v1899 = vpack.c.b16 %v1861, %v1859
        %v1900 = vpack.c.b16 %v1862, %v1860
        %v1901 = vpack.c.b16 %v1865, %v1863
        %v1902 = vpack.c.b16 %v1866, %v1864
        %v1903 = vpack.c.b16 %v1869, %v1867
        %v1904 = vpack.c.b16 %v1870, %v1868
        %v1905 = vpack.c.b16 %v1873, %v1871
        %v1906 = vpack.c.b16 %v1874, %v1872
        %1939 = vmatprep.subr.bf16.mxu0 %v1890
        %1940 = vmatpush1.bf16.msra.mxu0 %v1889
        %1941 = vmatprep.subr.bf16.mxu0 %v1888
        %1942 = vmatpush1.bf16.msra.mxu0 %v1887
        %1943 = vmatprep.subr.bf16.mxu0 %v1886
        %1944 = vmatpush1.bf16.msra.mxu0 %v1885
        %1945 = vmatprep.subr.bf16.mxu0 %v1884
        %1946 = vmatpush1.bf16.msra.mxu0 %v1883
        %1947 = vmatprep.subr.bf16.mxu0 %v1882
        %1948 = vmatpush1.bf16.msra.mxu0 %v1881
        %1949 = vmatprep.subr.bf16.mxu0 %v1880
        %1950 = vmatpush1.bf16.msra.mxu0 %v1879
        %1951 = vmatprep.subr.bf16.mxu0 %v1878
        %1952 = vmatpush1.bf16.msra.mxu0 %v1877
        %1953 = vmatprep.subr.bf16.mxu0 %v1876
        %1954 = vmatpush1.bf16.msra.mxu0 %v1875
        %1955 = vmatprep.subr.bf16.mxu0 %v1906
        %1956 = vmatpush2.bf16.msra.mxu0 %v1905
        %1957 = vmatprep.subr.bf16.mxu0 %v1904
        %1958 = vmatpush2.bf16.msra.mxu0 %v1903
        %1959 = vmatprep.subr.bf16.mxu0 %v1902
        %1960 = vmatpush2.bf16.msra.mxu0 %v1901
        %1961 = vmatprep.subr.bf16.mxu0 %v1900
        %1962 = vmatpush2.bf16.msra.mxu0 %v1899
        %1963 = vmatprep.subr.bf16.mxu0 %v1898
        %1964 = vmatpush2.bf16.msra.mxu0 %v1897
        %1965 = vmatprep.subr.bf16.mxu0 %v1896
        %1966 = vmatpush2.bf16.msra.mxu0 %v1895
        %1967 = vmatprep.subr.bf16.mxu0 %v1894
        %1968 = vmatpush2.bf16.msra.mxu0 %v1893
        %1969 = vmatprep.subr.bf16.mxu0 %v1892
        %1970 = vmatpush2.bf16.msra.mxu0 %v1891
        %1971 = vmatprep.mubr.bf16.mxu0 %v1734
        %1972 = vmatmul.mubr.bf16.gmra.mxu0 %v1733
        %v1973 = vpop.f32.mrf.mxu0
        %v1974 = vadd.f32 %v1772, %v1973
        %v1975 = vpop.f32.mrf.mxu0
        %v1976 = vadd.f32 %v1776, %v1975
        %v1977 = vpop.f32.mrf.mxu0
        %v1978 = vadd.f32 %v1772, %v1977
        %v1979 = vpop.f32.mrf.mxu0
        %v1980 = vadd.f32 %v1776, %v1979
        %1981 = vdwg.mxu0
        %v1982 = vtanh.pop %v1974
        %v1983 = vtanh.pop %v1978
        %v1984 = vxor.u32 %v1976, 2147483648
        %v1985 = vxor.u32 %v1980, 2147483648
        %v1986 = vmul.f32 %v1984, 1.442695
        %v1987 = vpow.pop %v1986
        %v1988 = vmul.f32 %v1985, 1.442695
        %v1989 = vpow.pop %v1988
        %v1990 = vadd.f32 %v1987, 1.0
        %v1991 = vadd.f32 %v1989, 1.0
        %v1992 = vrcp.pop %v1990
        %v1993 = vmul.f32 1.0, %v1992
        %v1994 = vrcp.pop %v1991
        %v1995 = vmul.f32 1.0, %v1994
        %v1996 = vmul.f32 %v1982, %v1993
        %v1997 = vmul.f32 %v1983, %v1995
        %v1998 = vadd.f32 %v1996, %v1721
        %v1999 = vadd.f32 %v1997, %v1724
        %v2000 = vmax.f32 %v1998, 0.0
        %v2001 = vmax.f32 %v1999, 0.0
        %2002 = vst [vmem:[#allocation2 + $0x8] sm:$0xff] %v2000
        %2003 = vst [vmem:[#allocation2 + $0x10] sm:$0xff] %v2001
        %v2004 = vld [vmem:[#allocation2 + $0x4] sm:$0xff]
        %v2005 = vld [vmem:[#allocation2 + $0xc] sm:$0xff]
        %v2006 = vld [vmem:[#allocation2 + $0x8] sm:$0xff]
        %v2007 = vld [vmem:[#allocation2 + $0x10] sm:$0xff]
        %v2008 = vpack.c.bf16 %v2005, %v2004
        %v2009 = vpack.c.bf16 %v2007, %v2006
        %v2010 = vld [vmem:[%s13] sm:$0xf]
        %v2011 = vld [vmem:[%s13 + $0x4] sm:$0xf]
        %v2012 = vld [vmem:[%s13 + $0x8] sm:$0xf]
        %v2013 = vld [vmem:[%s13 + $0xc] sm:$0xf]
        %v2014 = vld [vmem:[%s13 + $0x10] sm:$0xf]
        %v2015 = vld [vmem:[%s13 + $0x14] sm:$0xf]
        %v2016 = vld [vmem:[%s13 + $0x18] sm:$0xf]
        %v2017 = vld [vmem:[%s13 + $0x1c] sm:$0xf]
        %v2018 = vld [vmem:[%s13 + $0x20] sm:$0xf]
        %v2019 = vld [vmem:[%s13 + $0x24] sm:$0xf]
        %v2020 = vld [vmem:[%s13 + $0x28] sm:$0xf]
        %v2021 = vld [vmem:[%s13 + $0x2c] sm:$0xf]
        %v2022 = vld [vmem:[%s13 + $0x30] sm:$0xf]
        %v2023 = vld [vmem:[%s13 + $0x34] sm:$0xf]
        %v2024 = vld [vmem:[%s13 + $0x38] sm:$0xf]
        %v2025 = vld [vmem:[%s13 + $0x3c] sm:$0xf]
        %v2026 = vld [vmem:[%s13 + $0x40] sm:$0xf]
        %v2027 = vld [vmem:[%s13 + $0x44] sm:$0xf]
        %v2028 = vld [vmem:[%s13 + $0x48] sm:$0xf]
        %v2029 = vld [vmem:[%s13 + $0x4c] sm:$0xf]
        %v2030 = vld [vmem:[%s13 + $0x50] sm:$0xf]
        %v2031 = vld [vmem:[%s13 + $0x54] sm:$0xf]
        %v2032 = vld [vmem:[%s13 + $0x58] sm:$0xf]
        %v2033 = vld [vmem:[%s13 + $0x5c] sm:$0xf]
        %v2034 = vld [vmem:[%s13 + $0x60] sm:$0xf]
        %v2035 = vld [vmem:[%s13 + $0x64] sm:$0xf]
        %v2036 = vld [vmem:[%s13 + $0x68] sm:$0xf]
        %v2037 = vld [vmem:[%s13 + $0x6c] sm:$0xf]
        %v2038 = vld [vmem:[%s13 + $0x70] sm:$0xf]
        %v2039 = vld [vmem:[%s13 + $0x74] sm:$0xf]
        %v2040 = vld [vmem:[%s13 + $0x78] sm:$0xf]
        %v2041 = vld [vmem:[%s13 + $0x7c] sm:$0xf]
        %v2042 = vld [vmem:[#allocation20] sm:$0x1]
        %v2044 = vlaneseq
        %v2045 = vshrl.u32 %v2044, 7
        %v2046 = vsub.s32 0, %v2045
        %v2047 = vrot.slane %v2042, %v2046
        %v2081 = vunpack.c.l.b16 %v2010
        %v2082 = vunpack.c.l.b16 %v2011
        %v2083 = vunpack.c.l.b16 %v2012
        %v2084 = vunpack.c.l.b16 %v2013
        %v2085 = vunpack.c.l.b16 %v2014
        %v2086 = vunpack.c.l.b16 %v2015
        %v2087 = vunpack.c.l.b16 %v2016
        %v2088 = vunpack.c.l.b16 %v2017
        %v2089 = vunpack.c.l.b16 %v2018
        %v2090 = vunpack.c.l.b16 %v2019
        %v2091 = vunpack.c.l.b16 %v2020
        %v2092 = vunpack.c.l.b16 %v2021
        %v2093 = vunpack.c.l.b16 %v2022
        %v2094 = vunpack.c.l.b16 %v2023
        %v2095 = vunpack.c.l.b16 %v2024
        %v2096 = vunpack.c.l.b16 %v2025
        %v2097 = vunpack.c.l.b16 %v2026
        %v2098 = vunpack.c.l.b16 %v2027
        %v2099 = vunpack.c.l.b16 %v2028
        %v2100 = vunpack.c.l.b16 %v2029
        %v2101 = vunpack.c.l.b16 %v2030
        %v2102 = vunpack.c.l.b16 %v2031
        %v2103 = vunpack.c.l.b16 %v2032
        %v2104 = vunpack.c.l.b16 %v2033
        %v2105 = vunpack.c.l.b16 %v2034
        %v2106 = vunpack.c.l.b16 %v2035
        %v2107 = vunpack.c.l.b16 %v2036
        %v2108 = vunpack.c.l.b16 %v2037
        %v2109 = vunpack.c.l.b16 %v2038
        %v2110 = vunpack.c.l.b16 %v2039
        %v2111 = vunpack.c.l.b16 %v2040
        %v2112 = vunpack.c.l.b16 %v2041
        %v2113 = vpack.c.b16 %v2082, %v2081
        %v2114 = vpack.c.b16 %v2084, %v2083
        %v2115 = vpack.c.b16 %v2086, %v2085
        %v2116 = vpack.c.b16 %v2088, %v2087
        %v2117 = vpack.c.b16 %v2090, %v2089
        %v2118 = vpack.c.b16 %v2092, %v2091
        %v2119 = vpack.c.b16 %v2094, %v2093
        %v2120 = vpack.c.b16 %v2096, %v2095
        %v2121 = vpack.c.b16 %v2098, %v2097
        %v2122 = vpack.c.b16 %v2100, %v2099
        %v2123 = vpack.c.b16 %v2102, %v2101
        %v2124 = vpack.c.b16 %v2104, %v2103
        %v2125 = vpack.c.b16 %v2106, %v2105
        %v2126 = vpack.c.b16 %v2108, %v2107
        %v2127 = vpack.c.b16 %v2110, %v2109
        %v2128 = vpack.c.b16 %v2112, %v2111
        %2145 = vmatprep.subr.bf16.mxu0 0
        %2146 = vmatpush1.bf16.msra.mxu0 %v2120
        %2147 = vmatprep.subr.bf16.mxu0 0
        %2148 = vmatpush1.bf16.msra.mxu0 %v2119
        %2149 = vmatprep.subr.bf16.mxu0 0
        %2150 = vmatpush1.bf16.msra.mxu0 %v2118
        %2151 = vmatprep.subr.bf16.mxu0 0
        %2152 = vmatpush1.bf16.msra.mxu0 %v2117
        %2153 = vmatprep.subr.bf16.mxu0 0
        %2154 = vmatpush1.bf16.msra.mxu0 %v2116
        %2155 = vmatprep.subr.bf16.mxu0 0
        %2156 = vmatpush1.bf16.msra.mxu0 %v2115
        %2157 = vmatprep.subr.bf16.mxu0 0
        %2158 = vmatpush1.bf16.msra.mxu0 %v2114
        %2159 = vmatprep.subr.bf16.mxu0 0
        %2160 = vmatpush1.bf16.msra.mxu0 %v2113
        %2161 = vmatprep.subr.bf16.mxu0 0
        %2162 = vmatpush2.bf16.msra.mxu0 %v2128
        %2163 = vmatprep.subr.bf16.mxu0 0
        %2164 = vmatpush2.bf16.msra.mxu0 %v2127
        %2165 = vmatprep.subr.bf16.mxu0 0
        %2166 = vmatpush2.bf16.msra.mxu0 %v2126
        %2167 = vmatprep.subr.bf16.mxu0 0
        %2168 = vmatpush2.bf16.msra.mxu0 %v2125
        %2169 = vmatprep.subr.bf16.mxu0 0
        %2170 = vmatpush2.bf16.msra.mxu0 %v2124
        %2171 = vmatprep.subr.bf16.mxu0 0
        %2172 = vmatpush2.bf16.msra.mxu0 %v2123
        %2173 = vmatprep.subr.bf16.mxu0 0
        %2174 = vmatpush2.bf16.msra.mxu0 %v2122
        %2175 = vmatprep.subr.bf16.mxu0 0
        %2176 = vmatpush2.bf16.msra.mxu0 %v2121
        %2177 = vmatprep.mubr.bf16.mxu0 %v2009
        %2178 = vmatmul.mubr.bf16.gmra.mxu0 %v2008
        %v2179 = vpop.f32.mrf.mxu0
        %v2180 = vadd.f32 %v2047, %v2179
        %v2181 = vpop.f32.mrf.mxu0
        %v2182 = vpop.f32.mrf.mxu0
        %v2183 = vadd.f32 %v2047, %v2182
        %v2184 = vpop.f32.mrf.mxu0
        %2185 = vdwg.mxu0
        %v2186 = vmax.f32 %v2180, 0.0
        %v2187 = vmax.f32 %v2183, 0.0
        %v2188 = vld [vmem:[#allocation23] sm:$0xf]
        %v2189 = vld [vmem:[#allocation23 + $0x4] sm:$0xf]
        %v2190 = vld [vmem:[#allocation23 + $0x8] sm:$0xf]
        %v2191 = vld [vmem:[#allocation23 + $0xc] sm:$0xf]
        %v2192 = vld [vmem:[#allocation23 + $0x10] sm:$0xf]
        %v2193 = vld [vmem:[#allocation23 + $0x14] sm:$0xf]
        %v2194 = vld [vmem:[#allocation23 + $0x18] sm:$0xf]
        %v2195 = vld [vmem:[#allocation23 + $0x1c] sm:$0xf]
        %v2196 = vld [vmem:[#allocation23 + $0x20] sm:$0xf]
        %v2197 = vld [vmem:[#allocation23 + $0x24] sm:$0xf]
        %v2198 = vld [vmem:[#allocation23 + $0x28] sm:$0xf]
        %v2199 = vld [vmem:[#allocation23 + $0x2c] sm:$0xf]
        %v2200 = vld [vmem:[#allocation23 + $0x30] sm:$0xf]
        %v2201 = vld [vmem:[#allocation23 + $0x34] sm:$0xf]
        %v2202 = vld [vmem:[#allocation23 + $0x38] sm:$0xf]
        %v2203 = vld [vmem:[#allocation23 + $0x3c] sm:$0xf]
        %v2204 = vld [vmem:[%s18] sm:$0x1]
        %v2206 = vlaneseq
        %v2207 = vshrl.u32 %v2206, 7
        %v2208 = vsub.s32 0, %v2207
        %v2209 = vrot.slane %v2204, %v2208
        %v2227 = vunpack.c.l.b16 %v2188
        %v2228 = vunpack.c.l.b16 %v2189
        %v2229 = vunpack.c.l.b16 %v2190
        %v2230 = vunpack.c.l.b16 %v2191
        %v2231 = vunpack.c.l.b16 %v2192
        %v2232 = vunpack.c.l.b16 %v2193
        %v2233 = vunpack.c.l.b16 %v2194
        %v2234 = vunpack.c.l.b16 %v2195
        %v2235 = vunpack.c.l.b16 %v2196
        %v2236 = vunpack.c.l.b16 %v2197
        %v2237 = vunpack.c.l.b16 %v2198
        %v2238 = vunpack.c.l.b16 %v2199
        %v2239 = vunpack.c.l.b16 %v2200
        %v2240 = vunpack.c.l.b16 %v2201
        %v2241 = vunpack.c.l.b16 %v2202
        %v2242 = vunpack.c.l.b16 %v2203
        %v2243 = vpack.c.b16 %v2228, %v2227
        %v2244 = vpack.c.b16 %v2230, %v2229
        %v2245 = vpack.c.b16 %v2232, %v2231
        %v2246 = vpack.c.b16 %v2234, %v2233
        %v2247 = vpack.c.b16 %v2236, %v2235
        %v2248 = vpack.c.b16 %v2238, %v2237
        %v2249 = vpack.c.b16 %v2240, %v2239
        %v2250 = vpack.c.b16 %v2242, %v2241
        %2259 = vmatprep.subr.bf16.mxu0 0
        %2260 = vmatpush1.bf16.msra.mxu0 %v2250
        %2261 = vmatprep.subr.bf16.mxu0 0
        %2262 = vmatpush1.bf16.msra.mxu0 %v2249
        %2263 = vmatprep.subr.bf16.mxu0 0
        %2264 = vmatpush1.bf16.msra.mxu0 %v2248
        %2265 = vmatprep.subr.bf16.mxu0 0
        %2266 = vmatpush1.bf16.msra.mxu0 %v2247
        %2267 = vmatprep.subr.bf16.mxu0 0
        %2268 = vmatpush1.bf16.msra.mxu0 %v2246
        %2269 = vmatprep.subr.bf16.mxu0 0
        %2270 = vmatpush1.bf16.msra.mxu0 %v2245
        %2271 = vmatprep.subr.bf16.mxu0 0
        %2272 = vmatpush1.bf16.msra.mxu0 %v2244
        %2273 = vmatprep.subr.bf16.mxu0 0
        %2274 = vmatpush1.bf16.msra.mxu0 %v2243
        %2275 = vmatprep.subr.bf16.mxu0 0
        %2276 = vmatpush2.bf16.msra.mxu0 0
        %2277 = vmatprep.subr.bf16.mxu0 0
        %2278 = vmatpush2.bf16.msra.mxu0 0
        %2279 = vmatprep.subr.bf16.mxu0 0
        %2280 = vmatpush2.bf16.msra.mxu0 0
        %2281 = vmatprep.subr.bf16.mxu0 0
        %2282 = vmatpush2.bf16.msra.mxu0 0
        %2283 = vmatprep.subr.bf16.mxu0 0
        %2284 = vmatpush2.bf16.msra.mxu0 0
        %2285 = vmatprep.subr.bf16.mxu0 0
        %2286 = vmatpush2.bf16.msra.mxu0 0
        %2287 = vmatprep.subr.bf16.mxu0 0
        %2288 = vmatpush2.bf16.msra.mxu0 0
        %2289 = vmatprep.subr.bf16.mxu0 0
        %2290 = vmatpush2.bf16.msra.mxu0 0
        %2291 = vmatprep.mubr.bf16.mxu0 0
        %2292 = vmatmul.mubr.bf16.gmra.mxu0 %v2009
        %v2293 = vpop.f32.mrf.mxu0
        %v2294 = vadd.f32 %v2209, %v2293
        %v2295 = vpop.f32.mrf.mxu0
        %v2296 = vpop.f32.mrf.mxu0
        %v2297 = vadd.f32 %v2209, %v2296
        %v2298 = vpop.f32.mrf.mxu0
        %2299 = vdwg.mxu0
        %2300 = vst [vmem:[#allocation2 + $0x8] sm:$0xff] %v2186
        %2301 = vst [vmem:[#allocation2 + $0x10] sm:$0xff] %v2187
        %v2302 = vld [vmem:[#allocation2 + $0x4] sm:$0xff]
        %v2303 = vld [vmem:[#allocation2 + $0xc] sm:$0xff]
        %v2304 = vld [vmem:[#allocation2 + $0x8] sm:$0xff]
        %v2305 = vld [vmem:[#allocation2 + $0x10] sm:$0xff]
        %v2306 = vpack.c.bf16 %v2303, %v2302
        %v2307 = vpack.c.bf16 %v2305, %v2304
        %v2308 = vld [vmem:[#allocation22] sm:$0xff]
        %v2309 = vld [vmem:[#allocation22 + $0x8] sm:$0xff]
        %v2310 = vld [vmem:[#allocation22 + $0x10] sm:$0xff]
        %v2311 = vld [vmem:[#allocation22 + $0x18] sm:$0xff]
        %v2312 = vld [vmem:[#allocation22 + $0x20] sm:$0xff]
        %v2313 = vld [vmem:[#allocation22 + $0x28] sm:$0xff]
        %v2314 = vld [vmem:[#allocation22 + $0x30] sm:$0xff]
        %v2315 = vld [vmem:[#allocation22 + $0x38] sm:$0xff]
        %v2316 = vld [vmem:[#allocation22 + $0x40] sm:$0xff]
        %v2317 = vld [vmem:[#allocation22 + $0x48] sm:$0xff]
        %v2318 = vld [vmem:[#allocation22 + $0x50] sm:$0xff]
        %v2319 = vld [vmem:[#allocation22 + $0x58] sm:$0xff]
        %v2320 = vld [vmem:[#allocation22 + $0x60] sm:$0xff]
        %v2321 = vld [vmem:[#allocation22 + $0x68] sm:$0xff]
        %v2322 = vld [vmem:[#allocation22 + $0x70] sm:$0xff]
        %v2323 = vld [vmem:[#allocation22 + $0x78] sm:$0xff]
        %v2324 = vld [vmem:[#allocation22 + $0x80] sm:$0xff]
        %v2325 = vld [vmem:[#allocation22 + $0x88] sm:$0xff]
        %v2326 = vld [vmem:[#allocation22 + $0x90] sm:$0xff]
        %v2327 = vld [vmem:[#allocation22 + $0x98] sm:$0xff]
        %v2328 = vld [vmem:[#allocation22 + $0xa0] sm:$0xff]
        %v2329 = vld [vmem:[#allocation22 + $0xa8] sm:$0xff]
        %v2330 = vld [vmem:[#allocation22 + $0xb0] sm:$0xff]
        %v2331 = vld [vmem:[#allocation22 + $0xb8] sm:$0xff]
        %v2332 = vld [vmem:[#allocation22 + $0xc0] sm:$0xff]
        %v2333 = vld [vmem:[#allocation22 + $0xc8] sm:$0xff]
        %v2334 = vld [vmem:[#allocation22 + $0xd0] sm:$0xff]
        %v2335 = vld [vmem:[#allocation22 + $0xd8] sm:$0xff]
        %v2336 = vld [vmem:[#allocation22 + $0xe0] sm:$0xff]
        %v2337 = vld [vmem:[#allocation22 + $0xe8] sm:$0xff]
        %v2338 = vld [vmem:[#allocation22 + $0xf0] sm:$0xff]
        %v2339 = vld [vmem:[#allocation22 + $0xf8] sm:$0xff]
        %v2340 = vld [vmem:[%s16] sm:$0x3]
        %v2342 = vlaneseq
        %v2343 = vshrl.u32 %v2342, 7
        %v2344 = vsub.s32 0, %v2343
        %v2345 = vrot.slane %v2340, %v2344
        %v2346 = vlaneseq
        %v2347 = vshrl.u32 %v2346, 7
        %v2348 = vsub.s32 1, %v2347
        %v2349 = vrot.slane %v2340, %v2348
        %v2384 = vunpack.c.l.b16 %v2308
        %v2385 = vunpack.c.h.b16 %v2308
        %v2386 = vunpack.c.l.b16 %v2309
        %v2387 = vunpack.c.h.b16 %v2309
        %v2388 = vunpack.c.l.b16 %v2310
        %v2389 = vunpack.c.h.b16 %v2310
        %v2390 = vunpack.c.l.b16 %v2311
        %v2391 = vunpack.c.h.b16 %v2311
        %v2392 = vunpack.c.l.b16 %v2312
        %v2393 = vunpack.c.h.b16 %v2312
        %v2394 = vunpack.c.l.b16 %v2313
        %v2395 = vunpack.c.h.b16 %v2313
        %v2396 = vunpack.c.l.b16 %v2314
        %v2397 = vunpack.c.h.b16 %v2314
        %v2398 = vunpack.c.l.b16 %v2315
        %v2399 = vunpack.c.h.b16 %v2315
        %v2400 = vunpack.c.l.b16 %v2316
        %v2401 = vunpack.c.h.b16 %v2316
        %v2402 = vunpack.c.l.b16 %v2317
        %v2403 = vunpack.c.h.b16 %v2317
        %v2404 = vunpack.c.l.b16 %v2318
        %v2405 = vunpack.c.h.b16 %v2318
        %v2406 = vunpack.c.l.b16 %v2319
        %v2407 = vunpack.c.h.b16 %v2319
        %v2408 = vunpack.c.l.b16 %v2320
        %v2409 = vunpack.c.h.b16 %v2320
        %v2410 = vunpack.c.l.b16 %v2321
        %v2411 = vunpack.c.h.b16 %v2321
        %v2412 = vunpack.c.l.b16 %v2322
        %v2413 = vunpack.c.h.b16 %v2322
        %v2414 = vunpack.c.l.b16 %v2323
        %v2415 = vunpack.c.h.b16 %v2323
        %v2416 = vunpack.c.l.b16 %v2324
        %v2417 = vunpack.c.h.b16 %v2324
        %v2418 = vunpack.c.l.b16 %v2325
        %v2419 = vunpack.c.h.b16 %v2325
        %v2420 = vunpack.c.l.b16 %v2326
        %v2421 = vunpack.c.h.b16 %v2326
        %v2422 = vunpack.c.l.b16 %v2327
        %v2423 = vunpack.c.h.b16 %v2327
        %v2424 = vunpack.c.l.b16 %v2328
        %v2425 = vunpack.c.h.b16 %v2328
        %v2426 = vunpack.c.l.b16 %v2329
        %v2427 = vunpack.c.h.b16 %v2329
        %v2428 = vunpack.c.l.b16 %v2330
        %v2429 = vunpack.c.h.b16 %v2330
        %v2430 = vunpack.c.l.b16 %v2331
        %v2431 = vunpack.c.h.b16 %v2331
        %v2432 = vunpack.c.l.b16 %v2332
        %v2433 = vunpack.c.h.b16 %v2332
        %v2434 = vunpack.c.l.b16 %v2333
        %v2435 = vunpack.c.h.b16 %v2333
        %v2436 = vunpack.c.l.b16 %v2334
        %v2437 = vunpack.c.h.b16 %v2334
        %v2438 = vunpack.c.l.b16 %v2335
        %v2439 = vunpack.c.h.b16 %v2335
        %v2440 = vunpack.c.l.b16 %v2336
        %v2441 = vunpack.c.h.b16 %v2336
        %v2442 = vunpack.c.l.b16 %v2337
        %v2443 = vunpack.c.h.b16 %v2337
        %v2444 = vunpack.c.l.b16 %v2338
        %v2445 = vunpack.c.h.b16 %v2338
        %v2446 = vunpack.c.l.b16 %v2339
        %v2447 = vunpack.c.h.b16 %v2339
        %v2448 = vpack.c.b16 %v2386, %v2384
        %v2449 = vpack.c.b16 %v2387, %v2385
        %v2450 = vpack.c.b16 %v2390, %v2388
        %v2451 = vpack.c.b16 %v2391, %v2389
        %v2452 = vpack.c.b16 %v2394, %v2392
        %v2453 = vpack.c.b16 %v2395, %v2393
        %v2454 = vpack.c.b16 %v2398, %v2396
        %v2455 = vpack.c.b16 %v2399, %v2397
        %v2456 = vpack.c.b16 %v2402, %v2400
        %v2457 = vpack.c.b16 %v2403, %v2401
        %v2458 = vpack.c.b16 %v2406, %v2404
        %v2459 = vpack.c.b16 %v2407, %v2405
        %v2460 = vpack.c.b16 %v2410, %v2408
        %v2461 = vpack.c.b16 %v2411, %v2409
        %v2462 = vpack.c.b16 %v2414, %v2412
        %v2463 = vpack.c.b16 %v2415, %v2413
        %v2464 = vpack.c.b16 %v2418, %v2416
        %v2465 = vpack.c.b16 %v2419, %v2417
        %v2466 = vpack.c.b16 %v2422, %v2420
        %v2467 = vpack.c.b16 %v2423, %v2421
        %v2468 = vpack.c.b16 %v2426, %v2424
        %v2469 = vpack.c.b16 %v2427, %v2425
        %v2470 = vpack.c.b16 %v2430, %v2428
        %v2471 = vpack.c.b16 %v2431, %v2429
        %v2472 = vpack.c.b16 %v2434, %v2432
        %v2473 = vpack.c.b16 %v2435, %v2433
        %v2474 = vpack.c.b16 %v2438, %v2436
        %v2475 = vpack.c.b16 %v2439, %v2437
        %v2476 = vpack.c.b16 %v2442, %v2440
        %v2477 = vpack.c.b16 %v2443, %v2441
        %v2478 = vpack.c.b16 %v2446, %v2444
        %v2479 = vpack.c.b16 %v2447, %v2445
        %2512 = vmatprep.subr.bf16.mxu0 %v2463
        %2513 = vmatpush1.bf16.msra.mxu0 %v2462
        %2514 = vmatprep.subr.bf16.mxu0 %v2461
        %2515 = vmatpush1.bf16.msra.mxu0 %v2460
        %2516 = vmatprep.subr.bf16.mxu0 %v2459
        %2517 = vmatpush1.bf16.msra.mxu0 %v2458
        %2518 = vmatprep.subr.bf16.mxu0 %v2457
        %2519 = vmatpush1.bf16.msra.mxu0 %v2456
        %2520 = vmatprep.subr.bf16.mxu0 %v2455
        %2521 = vmatpush1.bf16.msra.mxu0 %v2454
        %2522 = vmatprep.subr.bf16.mxu0 %v2453
        %2523 = vmatpush1.bf16.msra.mxu0 %v2452
        %2524 = vmatprep.subr.bf16.mxu0 %v2451
        %2525 = vmatpush1.bf16.msra.mxu0 %v2450
        %2526 = vmatprep.subr.bf16.mxu0 %v2449
        %2527 = vmatpush1.bf16.msra.mxu0 %v2448
        %2528 = vmatprep.subr.bf16.mxu0 %v2479
        %2529 = vmatpush2.bf16.msra.mxu0 %v2478
        %2530 = vmatprep.subr.bf16.mxu0 %v2477
        %2531 = vmatpush2.bf16.msra.mxu0 %v2476
        %2532 = vmatprep.subr.bf16.mxu0 %v2475
        %2533 = vmatpush2.bf16.msra.mxu0 %v2474
        %2534 = vmatprep.subr.bf16.mxu0 %v2473
        %2535 = vmatpush2.bf16.msra.mxu0 %v2472
        %2536 = vmatprep.subr.bf16.mxu0 %v2471
        %2537 = vmatpush2.bf16.msra.mxu0 %v2470
        %2538 = vmatprep.subr.bf16.mxu0 %v2469
        %2539 = vmatpush2.bf16.msra.mxu0 %v2468
        %2540 = vmatprep.subr.bf16.mxu0 %v2467
        %2541 = vmatpush2.bf16.msra.mxu0 %v2466
        %2542 = vmatprep.subr.bf16.mxu0 %v2465
        %2543 = vmatpush2.bf16.msra.mxu0 %v2464
        %2544 = vmatprep.mubr.bf16.mxu0 %v2307
        %2545 = vmatmul.mubr.bf16.gmra.mxu0 %v2306
        %v2546 = vpop.f32.mrf.mxu0
        %v2547 = vadd.f32 %v2345, %v2546
        %v2548 = vpop.f32.mrf.mxu0
        %v2549 = vadd.f32 %v2349, %v2548
        %v2550 = vpop.f32.mrf.mxu0
        %v2551 = vadd.f32 %v2345, %v2550
        %v2552 = vpop.f32.mrf.mxu0
        %v2553 = vadd.f32 %v2349, %v2552
        %2554 = vdwg.mxu0
        %v2555 = vtanh.pop %v2547
        %v2556 = vtanh.pop %v2551
        %v2557 = vxor.u32 %v2549, 2147483648
        %v2558 = vxor.u32 %v2553, 2147483648
        %v2559 = vmul.f32 %v2557, 1.442695
        %v2560 = vpow.pop %v2559
        %v2561 = vmul.f32 %v2558, 1.442695
        %v2562 = vpow.pop %v2561
        %v2563 = vadd.f32 %v2560, 1.0
        %v2564 = vadd.f32 %v2562, 1.0
        %v2565 = vrcp.pop %v2563
        %v2566 = vmul.f32 1.0, %v2565
        %v2567 = vrcp.pop %v2564
        %v2568 = vmul.f32 1.0, %v2567
        %v2569 = vmul.f32 %v2555, %v2566
        %v2570 = vmul.f32 %v2556, %v2568
        %v2571 = vadd.f32 %v2569, %v2294
        %v2572 = vadd.f32 %v2570, %v2297
        %v2573 = vmax.f32 %v2571, 0.0
        %v2574 = vmax.f32 %v2572, 0.0
        %2575 = vst [vmem:[#allocation2 + $0x8] sm:$0xff] %v2573
        %2576 = vst [vmem:[#allocation2 + $0x10] sm:$0xff] %v2574
        %v2577 = vld [vmem:[#allocation2 + $0x8] sm:$0xff]
        %v2578 = vld [vmem:[#allocation2 + $0x10] sm:$0xff]
        %v2579 = vpack.c.bf16 %v2578, %v2577
        %v2580 = vld [vmem:[%s19] sm:$0xf]
        %v2581 = vld [vmem:[%s19 + $0x4] sm:$0xf]
        %v2582 = vld [vmem:[%s19 + $0x8] sm:$0xf]
        %v2583 = vld [vmem:[%s19 + $0xc] sm:$0xf]
        %v2584 = vld [vmem:[%s19 + $0x10] sm:$0xf]
        %v2585 = vld [vmem:[%s19 + $0x14] sm:$0xf]
        %v2586 = vld [vmem:[%s19 + $0x18] sm:$0xf]
        %v2587 = vld [vmem:[%s19 + $0x1c] sm:$0xf]
        %v2588 = vld [vmem:[%s19 + $0x20] sm:$0xf]
        %v2589 = vld [vmem:[%s19 + $0x24] sm:$0xf]
        %v2590 = vld [vmem:[%s19 + $0x28] sm:$0xf]
        %v2591 = vld [vmem:[%s19 + $0x2c] sm:$0xf]
        %v2592 = vld [vmem:[%s19 + $0x30] sm:$0xf]
        %v2593 = vld [vmem:[%s19 + $0x34] sm:$0xf]
        %v2594 = vld [vmem:[%s19 + $0x38] sm:$0xf]
        %v2595 = vld [vmem:[%s19 + $0x3c] sm:$0xf]
        %v2596 = vld [vmem:[%s20] sm:$0x1]
        %v2598 = vlaneseq
        %v2599 = vshrl.u32 %v2598, 7
        %v2600 = vsub.s32 0, %v2599
        %v2601 = vrot.slane %v2596, %v2600
        %v2619 = vunpack.c.l.b16 %v2580
        %v2620 = vunpack.c.l.b16 %v2581
        %v2621 = vunpack.c.l.b16 %v2582
        %v2622 = vunpack.c.l.b16 %v2583
        %v2623 = vunpack.c.l.b16 %v2584
        %v2624 = vunpack.c.l.b16 %v2585
        %v2625 = vunpack.c.l.b16 %v2586
        %v2626 = vunpack.c.l.b16 %v2587
        %v2627 = vunpack.c.l.b16 %v2588
        %v2628 = vunpack.c.l.b16 %v2589
        %v2629 = vunpack.c.l.b16 %v2590
        %v2630 = vunpack.c.l.b16 %v2591
        %v2631 = vunpack.c.l.b16 %v2592
        %v2632 = vunpack.c.l.b16 %v2593
        %v2633 = vunpack.c.l.b16 %v2594
        %v2634 = vunpack.c.l.b16 %v2595
        %v2635 = vpack.c.b16 %v2620, %v2619
        %v2636 = vpack.c.b16 %v2622, %v2621
        %v2637 = vpack.c.b16 %v2624, %v2623
        %v2638 = vpack.c.b16 %v2626, %v2625
        %v2639 = vpack.c.b16 %v2628, %v2627
        %v2640 = vpack.c.b16 %v2630, %v2629
        %v2641 = vpack.c.b16 %v2632, %v2631
        %v2642 = vpack.c.b16 %v2634, %v2633
        %2651 = vmatprep.subr.bf16.mxu0 0
        %2652 = vmatpush1.bf16.msra.mxu0 %v2642
        %2653 = vmatprep.subr.bf16.mxu0 0
        %2654 = vmatpush1.bf16.msra.mxu0 %v2641
        %2655 = vmatprep.subr.bf16.mxu0 0
        %2656 = vmatpush1.bf16.msra.mxu0 %v2640
        %2657 = vmatprep.subr.bf16.mxu0 0
        %2658 = vmatpush1.bf16.msra.mxu0 %v2639
        %2659 = vmatprep.subr.bf16.mxu0 0
        %2660 = vmatpush1.bf16.msra.mxu0 %v2638
        %2661 = vmatprep.subr.bf16.mxu0 0
        %2662 = vmatpush1.bf16.msra.mxu0 %v2637
        %2663 = vmatprep.subr.bf16.mxu0 0
        %2664 = vmatpush1.bf16.msra.mxu0 %v2636
        %2665 = vmatprep.subr.bf16.mxu0 0
        %2666 = vmatpush1.bf16.msra.mxu0 %v2635
        %2667 = vmatprep.subr.bf16.mxu0 0
        %2668 = vmatpush2.bf16.msra.mxu0 0
        %2669 = vmatprep.subr.bf16.mxu0 0
        %2670 = vmatpush2.bf16.msra.mxu0 0
        %2671 = vmatprep.subr.bf16.mxu0 0
        %2672 = vmatpush2.bf16.msra.mxu0 0
        %2673 = vmatprep.subr.bf16.mxu0 0
        %2674 = vmatpush2.bf16.msra.mxu0 0
        %2675 = vmatprep.subr.bf16.mxu0 0
        %2676 = vmatpush2.bf16.msra.mxu0 0
        %2677 = vmatprep.subr.bf16.mxu0 0
        %2678 = vmatpush2.bf16.msra.mxu0 0
        %2679 = vmatprep.subr.bf16.mxu0 0
        %2680 = vmatpush2.bf16.msra.mxu0 0
        %2681 = vmatprep.subr.bf16.mxu0 0
        %2682 = vmatpush2.bf16.msra.mxu0 0
        %2683 = vmatprep.mubr.bf16.mxu0 0
        %2684 = vmatmul.mubr.bf16.gmra.mxu0 %v2579
        %v2685 = vpop.f32.mrf.mxu0
        %v2686 = vadd.f32 %v2601, %v2685
        %v2687 = vpop.f32.mrf.mxu0
        %v2688 = vpop.f32.mrf.mxu0
        %v2689 = vadd.f32 %v2601, %v2688
        %v2690 = vpop.f32.mrf.mxu0
        %2691 = vdwg.mxu0
        %vm2692 = vcmask 64512
        %2693 = vst.msk [vmem:[%s848] sm:$0xff] %vm2692, %v2686
        %2694 = vst.msk [vmem:[%s848 + $0x8] sm:$0xff] %vm2692, %v2689
        %p2695 = scmp.lt.s32.totalorder %s40, 1
        %s2696 = scalar_select %p2695, %s40, 1
        %s2697 = smul.addr %s2696, 2
        %s2698 = smul.addr %s2697, 8
        %s2699 = scalar_lea.vmem %s21, %s2698
        // Predicated region
        $region161: #{tpu_custom_call.1} parent=103 // pred_check
          %p2700 = pneg %p504
        $region162: #{tpu_custom_call.1} parent=103 // pred_check_branch
          %2702 = sbr.rel (%p2700) target = $region164
        $region163: #{tpu_custom_call.1} parent=103 // pred_region
          _
        $region164: #{tpu_custom_call.1} parent=103 // pred_fallthru
          _
      $region104: #{tpu_custom_call.1} parent=5 // pred_fallthru
        _
      %p2703 = scmp.le.s32.totalorder 2, %s35
      // Predicated region
      $region165: #{tpu_custom_call.1} parent=5 // pred_check
        %p2704 = pneg %p2703
      $region166: #{tpu_custom_call.1} parent=5 // pred_check_branch
        %2706 = sbr.rel (%p2704) target = $region168
      $region167: #{tpu_custom_call.1} parent=5 // pred_region
        %s2707 = ssub.s32 %s35, 2
        // Predicated region
        $region169: #{tpu_custom_call.1} parent=167 // pred_check
          %p2708 = pneg %p510
        $region170: #{tpu_custom_call.1} parent=167 // pred_check_branch
          %2710 = sbr.rel (%p2708) target = $region172
        $region171: #{tpu_custom_call.1} parent=167 // pred_region
          %p2711 = scmp.lt.s32.totalorder %s41, 1
          %s2712 = scalar_select %p2711, %s41, 1
          %s2713 = smul.addr %s2712, 2
          %s2714 = smul.addr %s2713, 8
          %s2715 = scalar_lea.vmem %s21, %s2714
        $region172: #{tpu_custom_call.1} parent=167 // pred_fallthru
          _
      $region168: #{tpu_custom_call.1} parent=5 // pred_fallthru
        _
    $region6: #{tpu_custom_call.1} parent=1 // loop_footer
      %s39 = sadd.s32 1, %s35
    $region7: #{tpu_custom_call.1} parent=1 // loop_footer_branch
      %34 = sbr.rel target = $region3
    $region8: #{tpu_custom_call.1} parent=1 // loop_exit
      _
    %2716 = vsyncpa [#allocation4], 1
    %s2717 = scalar_lea.sflag [#allocation4], 1
    %2718 = vsyncpa %s2717, 1
    %2719 = vsyncpa [#allocation6], 1
    %2720 = vsyncpa [#allocation9], 1
    %2721 = vsyncpa [#allocation12], 1
    %2722 = vsyncpa [#allocation15], 1
    %2723 = vsyncpa [#allocation18], 1
    %2724 = vsyncpa [#allocation21], 1
    %2725 = vsyncpa [#allocation24], 1

</llo_original>
